<compile_context>
chip_gen: v6e
topology: v6e:2x2x1
jax: 0.10.0
libtpu: 0.0.40
codegen_flags: <defaults>
</compile_context>

<pallas_src>
import functools

import jax
import jax.numpy as jnp
from jax.experimental import pallas as pl
from jax.experimental.pallas import tpu as pltpu


def _round_up(x, m):
    return ((x + m - 1) // m) * m


def _pick_tile(total, cap):
    """Largest multiple-of-128 divisor of `total` (itself a multiple of 128) <= cap."""
    if total <= cap:
        return total
    t = (cap // 128) * 128
    while total % t:
        t -= 128
    return t


def _cparams(*sems):
    # 32 MiB scoped VMEM: above the v5e 16 MiB default, equal to the v6e/v7x
    # defaults, and >= 2x the worst-case tile footprint used below.
    return pltpu.CompilerParams(
        dimension_semantics=tuple(sems),
        vmem_limit_bytes=32 * 1024 * 1024,
    )


# ----------------------------------------------------------------------------
# Tiled matmul + bias (bf16 inputs, f32 accumulation)
# ----------------------------------------------------------------------------
def _matmul_bias_kernel(x_ref, w_ref, b_ref, o_ref, acc_ref):
    @pl.when(pl.program_id(2) == 0)
    def _():
        acc_ref[...] = jnp.zeros_like(acc_ref)

    acc_ref[...] += jnp.dot(
        x_ref[...], w_ref[...], preferred_element_type=jnp.float32
    )

    @pl.when(pl.program_id(2) == pl.num_programs(2) - 1)
    def _():
        o_ref[...] = (acc_ref[...] + b_ref[...]).astype(o_ref.dtype)


def pallas_matmul_bias(x, w, b, out_dtype=jnp.bfloat16):
    """x: [M, K] @ w: [K, N] + b: [N] -> [M, N].

    M is never padded (ragged last tile; out-of-bounds rows are dropped on
    store).  K is only padded/split when K > 2048; N only when N needs 128
    alignment for a multi-tile split."""
    m, k = x.shape
    k2, n = w.shape
    assert k == k2

    if k <= 2048:                       # single K step, no padding needed
        k_pad, tk = k, k
    else:
        k_pad = _round_up(k, 128)
        tk = _pick_tile(k_pad, 2048)
    if n <= 512 and (n % 128 == 0 or n < 128):
        n_pad, tn = n, n
    else:
        n_pad = _round_up(n, 128)
        tn = _pick_tile(n_pad, 512)
    tm = m if m <= 512 else 512

    xb = x.astype(jnp.bfloat16)
    wb = w.astype(jnp.bfloat16)
    bb = b.astype(jnp.float32)
    if k_pad != k:
        xb = jnp.pad(xb, ((0, 0), (0, k_pad - k)))
        wb = jnp.pad(wb, ((0, k_pad - k), (0, 0)))
    if n_pad != n:
        wb = jnp.pad(wb, ((0, 0), (0, n_pad - n)))
        bb = jnp.pad(bb, (0, n_pad - n))
    bb = bb.reshape(1, n_pad)

    grid = (pl.cdiv(m, tm), n_pad // tn, k_pad // tk)
    out = pl.pallas_call(
        _matmul_bias_kernel,
        out_shape=jax.ShapeDtypeStruct((m, n_pad), out_dtype),
        grid_spec=pltpu.PrefetchScalarGridSpec(
            num_scalar_prefetch=0,
            grid=grid,
            in_specs=[
                pl.BlockSpec((tm, tk), lambda i, j, kk: (i, kk)),
                pl.BlockSpec((tk, tn), lambda i, j, kk: (kk, j)),
                pl.BlockSpec((1, tn), lambda i, j, kk: (0, j)),
            ],
            out_specs=pl.BlockSpec((tm, tn), lambda i, j, kk: (i, j)),
            scratch_shapes=[pltpu.VMEM((tm, tn), jnp.float32)],
        ),
        compiler_params=_cparams("parallel", "parallel", "arbitrary"),
    )(xb, wb, bb)
    return out if n_pad == n else out[:, :n]


# ----------------------------------------------------------------------------
# Stride-1 spatial conv: implicit im2col (halo'd image resident in VMEM)
# ----------------------------------------------------------------------------
def _conv_s1_kernel(x_ref, w_ref, b_ref, o_ref, acc_ref, *, kh, kw, ho, wo):
    cin = x_ref.shape[-1]
    acc_ref[...] = jnp.zeros_like(acc_ref)
    # All KH*KW taps are contiguous static slices of the halo'd image already
    # resident in VMEM -> the activation is read from HBM exactly once.
    for ih in range(kh):
        for iw in range(kw):
            win = x_ref[ih:ih + ho, iw:iw + wo, :].reshape(ho * wo, cin)
            acc_ref[...] += jnp.dot(
                win, w_ref[ih, iw], preferred_element_type=jnp.float32
            )
    o_ref[...] = (acc_ref[...] + b_ref[...]).astype(o_ref.dtype)


def _conv2d_implicit_s1(x, w, b, padding):
    n, h, wi, cin = x.shape
    kh, kw, _, cout = w.shape
    ho = h + 2 * padding - kh + 1
    wo = wi + 2 * padding - kw + 1
    xb = x.astype(jnp.bfloat16)
    if padding > 0:
        xb = jnp.pad(xb, ((0, 0), (padding, padding), (padding, padding), (0, 0)))
    hp, wp = h + 2 * padding, wi + 2 * padding

    out = pl.pallas_call(
        functools.partial(_conv_s1_kernel, kh=kh, kw=kw, ho=ho, wo=wo),
        out_shape=jax.ShapeDtypeStruct((n, ho * wo, cout), jnp.bfloat16),
        grid_spec=pltpu.PrefetchScalarGridSpec(
            num_scalar_prefetch=0,
            grid=(n,),
            in_specs=[
                pl.BlockSpec((None, hp, wp, cin), lambda nb: (nb, 0, 0, 0)),
                pl.BlockSpec((kh, kw, cin, cout), lambda nb: (0, 0, 0, 0)),
                pl.BlockSpec((1, cout), lambda nb: (0, 0)),
            ],
            out_specs=pl.BlockSpec((None, ho * wo, cout), lambda nb: (nb, 0, 0)),
            scratch_shapes=[pltpu.VMEM((ho * wo, cout), jnp.float32)],
        ),
        compiler_params=_cparams("parallel"),
    )(xb, w.astype(jnp.bfloat16), b.reshape(1, cout).astype(jnp.float32))
    return out.reshape(n, ho, wo, cout)


# ----------------------------------------------------------------------------
# Strided spatial conv fallback: explicit bf16 im2col + tiled matmul
# ----------------------------------------------------------------------------
def _conv2d_im2col(x, w, b, stride, padding):
    n, h, wi, cin = x.shape
    kh, kw, _, cout = w.shape
    ho = (h + 2 * padding - kh) // stride + 1
    wo = (wi + 2 * padding - kw) // stride + 1
    xb = x.astype(jnp.bfloat16)
    if padding > 0:
        xb = jnp.pad(xb, ((0, 0), (padding, padding), (padding, padding), (0, 0)))
    slices = []
    for ih in range(kh):
        for iw in range(kw):
            slices.append(
                xb[:, ih: ih + (ho - 1) * stride + 1: stride,
                   iw: iw + (wo - 1) * stride + 1: stride, :]
            )
    patches = jnp.stack(slices, axis=3).reshape(n * ho * wo, kh * kw * cin)
    wmat = w.astype(jnp.bfloat16).reshape(kh * kw * cin, cout)
    out = pallas_matmul_bias(patches, wmat, b)
    return out.reshape(n, ho, wo, cout)


def conv2d(x, w, b, stride, padding):
    kh, kw, cin, cout = w.shape
    if kh == 1 and kw == 1:
        xs = x if stride == 1 else x[:, ::stride, ::stride, :]
        n, ho, wo, _ = xs.shape
        out = pallas_matmul_bias(xs.reshape(n * ho * wo, cin),
                                 w.reshape(cin, cout), b)
        return out.reshape(n, ho, wo, cout)
    if stride == 1:
        return _conv2d_implicit_s1(x, w, b, padding)
    # TODO(synk): stride>1 spatial convs (7x7 stem + first 3x3 of layers 2-4)
    # still materialize explicit im2col patches; strided windows are not
    # expressible as rectangular BlockSpec tiles without in-kernel strided
    # slices.
    return _conv2d_im2col(x, w, b, stride, padding)


# ----------------------------------------------------------------------------
# BatchNorm (training-mode batch stats): sums -> scale/shift -> fused apply
# ----------------------------------------------------------------------------
def _bn_stats_kernel(x_ref, g_ref, b_ref, scale_ref, shift_ref, sum_ref, sq_ref,
                     *, count, eps, m, tm):
    i = pl.program_id(0)

    @pl.when(i == 0)
    def _():
        sum_ref[...] = jnp.zeros_like(sum_ref)
        sq_ref[...] = jnp.zeros_like(sq_ref)

    x = x_ref[...].astype(jnp.float32)
    rows = jax.lax.broadcasted_iota(jnp.int32, (x.shape[0], 1), 0) + i * tm
    x = jnp.where(rows < m, x, 0.0)          # mask ragged last tile
    sum_ref[...] += jnp.sum(x, axis=0, keepdims=True)
    sq_ref[...] += jnp.sum(x * x, axis=0, keepdims=True)

    @pl.when(i == pl.num_programs(0) - 1)
    def _():
        mean = sum_ref[...] * (1.0 / count)
        # TODO(synk): E[x^2]-mean^2 in f32 (clamped); a Welford / two-pass
        # variant would be numerically safer for very large activations.
        var = jnp.maximum(sq_ref[...] * (1.0 / count) - mean * mean, 0.0)
        scale = jax.lax.rsqrt(var + eps) * g_ref[...]
        scale_ref[...] = scale
        shift_ref[...] = b_ref[...] - mean * scale


def _bn_apply_kernel(x_ref, scale_ref, shift_ref, o_ref, *, relu):
    y = x_ref[...].astype(jnp.float32) * scale_ref[...] + shift_ref[...]
    if relu:
        y = jnp.maximum(y, 0.0)
    o_ref[...] = y.astype(o_ref.dtype)


def _bn_apply_add_relu_kernel(x_ref, r_ref, scale_ref, shift_ref, o_ref):
    y = (x_ref[...].astype(jnp.float32) * scale_ref[...] + shift_ref[...]
         + r_ref[...].astype(jnp.float32))
    o_ref[...] = jnp.maximum(y, 0.0).astype(o_ref.dtype)


def batchnorm2d(x, gamma, beta, relu=False, residual=None, eps=1e-5):
    """Training-mode BN over NHWC (bf16 in / bf16 out).  Per-channel scale and
    shift are computed once in the reduction kernel's epilogue; the apply pass
    is a single FMA (+ optional fused residual add + final ReLU) per element."""
    n, h, w, c = x.shape
    m = n * h * w
    tm = m if m <= 512 else 512
    grid = (pl.cdiv(m, tm),)
    x2 = x.reshape(m, c)
    g2 = gamma.reshape(1, c).astype(jnp.float32)
    b2 = beta.reshape(1, c).astype(jnp.float32)

    # Pass 1: per-channel sum / sum-of-squares, fused scale/shift epilogue.
    # TODO(synk): fold the partial sums into the conv matmul epilogue to save
    # one full read of the activation; give this pass a parallel grid axis for
    # v7x's two TensorCores.
    scale, shift = pl.pallas_call(
        functools.partial(_bn_stats_kernel, count=float(m), eps=eps, m=m, tm=tm),
        out_shape=(jax.ShapeDtypeStruct((1, c), jnp.float32),
                   jax.ShapeDtypeStruct((1, c), jnp.float32)),
        grid_spec=pltpu.PrefetchScalarGridSpec(
            num_scalar_prefetch=0,
            grid=grid,
            in_specs=[pl.BlockSpec((tm, c), lambda i: (i, 0)),
                      pl.BlockSpec((1, c), lambda i: (0, 0)),
                      pl.BlockSpec((1, c), lambda i: (0, 0))],
            out_specs=[pl.BlockSpec((1, c), lambda i: (0, 0)),
                       pl.BlockSpec((1, c), lambda i: (0, 0))],
            scratch_shapes=[pltpu.VMEM((1, c), jnp.float32),
                            pltpu.VMEM((1, c), jnp.float32)],
        ),
        compiler_params=_cparams("arbitrary"),
    )(x2, g2, b2)

    # Pass 2: normalize (+ residual add + ReLU), bf16 I/O.
    if residual is None:
        kern = functools.partial(_bn_apply_kernel, relu=relu)
        ins = (x2, scale, shift)
        in_specs = [pl.BlockSpec((tm, c), lambda i: (i, 0)),
                    pl.BlockSpec((1, c), lambda i: (0, 0)),
                    pl.BlockSpec((1, c), lambda i: (0, 0))]
    else:
        kern = _bn_apply_add_relu_kernel
        ins = (x2, residual.reshape(m, c), scale, shift)
        in_specs = [pl.BlockSpec((tm, c), lambda i: (i, 0)),
                    pl.BlockSpec((tm, c), lambda i: (i, 0)),
                    pl.BlockSpec((1, c), lambda i: (0, 0)),
                    pl.BlockSpec((1, c), lambda i: (0, 0))]

    out = pl.pallas_call(
        kern,
        out_shape=jax.ShapeDtypeStruct((m, c), jnp.bfloat16),
        grid_spec=pltpu.PrefetchScalarGridSpec(
            num_scalar_prefetch=0,
            grid=grid,
            in_specs=in_specs,
            out_specs=pl.BlockSpec((tm, c), lambda i: (i, 0)),
        ),
        compiler_params=_cparams("parallel"),
    )(*ins)
    return out.reshape(n, h, w, c)


# ----------------------------------------------------------------------------
# MaxPool 3x3/s2 (separable: W-direction then H-direction), gridded stack-max
# ----------------------------------------------------------------------------
def _stack_max_kernel(x_ref, o_ref):
    o_ref[...] = jnp.max(x_ref[...], axis=0)


def _stack_max(stack):
    # stack: [k, M, C] -> max over k (bf16)
    k, m, c = stack.shape
    tm = m if m <= 512 else 512
    return pl.pallas_call(
        _stack_max_kernel,
        out_shape=jax.ShapeDtypeStruct((m, c), stack.dtype),
        grid_spec=pltpu.PrefetchScalarGridSpec(
            num_scalar_prefetch=0,
            grid=(pl.cdiv(m, tm),),
            in_specs=[pl.BlockSpec((k, tm, c), lambda i: (0, i, 0))],
            out_specs=pl.BlockSpec((tm, c), lambda i: (i, 0)),
        ),
        compiler_params=_cparams("parallel"),
    )(stack)


def maxpool2d(x, k=3, stride=2, padding=1):
    # TODO(synk): fuse into one halo-tile kernel to avoid the tap stacks.
    n, h, w, c = x.shape
    ho = (h + 2 * padding - k) // stride + 1
    wo = (w + 2 * padding - k) // stride + 1
    hp = h + 2 * padding
    xp = jnp.pad(
        x,
        ((0, 0), (padding, padding), (padding, padding), (0, 0)),
        constant_values=-jnp.inf,
    )
    w_taps = [xp[:, :, iw: iw + (wo - 1) * stride + 1: stride, :] for iw in range(k)]
    t = _stack_max(jnp.stack(w_taps, 0).reshape(k, n * hp * wo, c))
    t = t.reshape(n, hp, wo, c)
    h_taps = [t[:, ih: ih + (ho - 1) * stride + 1: stride, :, :] for ih in range(k)]
    out = _stack_max(jnp.stack(h_taps, 0).reshape(k, n * ho * wo, c))
    return out.reshape(n, ho, wo, c)


# ----------------------------------------------------------------------------
# Global average pool (gridded over batch)
# ----------------------------------------------------------------------------
def _avgpool_kernel(x_ref, o_ref):
    o_ref[...] = jnp.mean(x_ref[...].astype(jnp.float32), axis=0, keepdims=True)


def global_avgpool(x):
    n, h, w, c = x.shape
    hw = h * w
    out = pl.pallas_call(
        _avgpool_kernel,
        out_shape=jax.ShapeDtypeStruct((n, 1, c), jnp.float32),
        grid_spec=pltpu.PrefetchScalarGridSpec(
            num_scalar_prefetch=0,
            grid=(n,),
            in_specs=[pl.BlockSpec((None, hw, c), lambda i: (i, 0, 0))],
            out_specs=pl.BlockSpec((None, 1, c), lambda i: (i, 0, 0)),
        ),
        compiler_params=_cparams("parallel"),
    )(x.reshape(n, hw, c))
    return out.reshape(n, c)


# ----------------------------------------------------------------------------
# Parameter initialization (deterministic, PyTorch-default-style uniform)
# ----------------------------------------------------------------------------
def init_conv(key, kh, kw, cin, cout):
    k1, k2 = jax.random.split(key)
    bound = 1.0 / jnp.sqrt(jnp.float32(cin * kh * kw))
    w = jax.random.uniform(
        k1, (kh, kw, cin, cout), minval=-bound, maxval=bound, dtype=jnp.float32
    )
    b = jax.random.uniform(k2, (cout,), minval=-bound, maxval=bound, dtype=jnp.float32)
    return {"w": w, "b": b}


def init_bn(c):
    return {"gamma": jnp.ones((c,), jnp.float32), "beta": jnp.zeros((c,), jnp.float32)}


def init_linear(key, cin, cout):
    k1, k2 = jax.random.split(key)
    bound = 1.0 / jnp.sqrt(jnp.float32(cin))
    w = jax.random.uniform(
        k1, (cin, cout), minval=-bound, maxval=bound, dtype=jnp.float32
    )
    b = jax.random.uniform(k2, (cout,), minval=-bound, maxval=bound, dtype=jnp.float32)
    return {"w": w, "b": b}


def init_resnet_params(key, layers, image_channels, num_classes):
    keys = iter(jax.random.split(key, 256))
    params = {"conv1": init_conv(next(keys), 7, 7, image_channels, 64),
              "bn1": init_bn(64)}
    in_ch = 64
    for li, (nblocks, inter, stride) in enumerate(
        zip(layers, [64, 128, 256, 512], [1, 2, 2, 2])
    ):
        blocks = []
        for bi in range(nblocks):
            s = stride if bi == 0 else 1
            bp = {
                "conv1": init_conv(next(keys), 1, 1, in_ch, inter),
                "bn1": init_bn(inter),
                "conv2": init_conv(next(keys), 3, 3, inter, inter),
                "bn2": init_bn(inter),
                "conv3": init_conv(next(keys), 1, 1, inter, inter * 4),
                "bn3": init_bn(inter * 4),
                "stride": s,
            }
            if bi == 0 and (s != 1 or in_ch != inter * 4):
                bp["downsample"] = {
                    "conv": init_conv(next(keys), 1, 1, in_ch, inter * 4),
                    "bn": init_bn(inter * 4),
                }
            blocks.append(bp)
            in_ch = inter * 4
        params[f"layer{li + 1}"] = blocks
    params["fc"] = init_linear(next(keys), 512 * 4, num_classes)
    return params


# ----------------------------------------------------------------------------
# Forward pass
# ----------------------------------------------------------------------------
def residual_block_forward(bp, x):
    identity = x
    s = bp["stride"]
    out = conv2d(x, bp["conv1"]["w"], bp["conv1"]["b"], stride=1, padding=0)
    out = batchnorm2d(out, bp["bn1"]["gamma"], bp["bn1"]["beta"], relu=True)
    out = conv2d(out, bp["conv2"]["w"], bp["conv2"]["b"], stride=s, padding=1)
    out = batchnorm2d(out, bp["bn2"]["gamma"], bp["bn2"]["beta"], relu=True)
    out = conv2d(out, bp["conv3"]["w"], bp["conv3"]["b"], stride=1, padding=0)
    if "downsample" in bp:
        dp = bp["downsample"]
        identity = conv2d(identity, dp["conv"]["w"], dp["conv"]["b"], stride=s, padding=0)
        identity = batchnorm2d(identity, dp["bn"]["gamma"], dp["bn"]["beta"], relu=False)
    # BN3 + residual add + final ReLU fused into one tiled apply pass.
    return batchnorm2d(out, bp["bn3"]["gamma"], bp["bn3"]["beta"], residual=identity)


def resnet_forward(params, x_nchw):
    # layout: NCHW (PyTorch) -> NHWC for TPU kernels; activations bf16 between kernels.
    x = jnp.transpose(x_nchw, (0, 2, 3, 1)).astype(jnp.float32)
    x = conv2d(x, params["conv1"]["w"], params["conv1"]["b"], stride=2, padding=3)
    x = batchnorm2d(x, params["bn1"]["gamma"], params["bn1"]["beta"], relu=True)
    x = maxpool2d(x, k=3, stride=2, padding=1)
    for li in range(4):
        for bp in params[f"layer{li + 1}"]:
            x = residual_block_forward(bp, x)
    pooled = global_avgpool(x)  # [N, 2048]  (AdaptiveAvgPool2d((1,1)) + flatten)
    logits = pallas_matmul_bias(pooled, params["fc"]["w"], params["fc"]["b"],
                                out_dtype=jnp.float32)
    return logits


# ----------------------------------------------------------------------------
if __name__ == "__main__":
    key = jax.random.PRNGKey(0)
    pkey, xkey = jax.random.split(key)

    # Small ResNet config: layers=[1,1,1,1], 3 input channels, 10 classes,
    # batch=2, 32x32 images.
    params = init_resnet_params(pkey, layers=[1, 1, 1, 1], image_channels=3,
                                num_classes=10)
    x = jax.random.normal(xkey, (2, 3, 32, 32), dtype=jnp.float32)

    logits = resnet_forward(params, x)
    jax.block_until_ready(logits)
    assert logits.shape == (2, 10)
    assert bool(jnp.all(jnp.isfinite(logits)))
    print("KERNEL_OK")
</pallas_src>

<mosaic_0001>
module attributes {stable_mosaic.version = 11 : i64} {
  func.func @_matmul_bias_kernel(%arg0: i32, %arg1: i32, %arg2: i32, %arg3: memref<512x147xbf16, #tpu.memory_space<vmem>>, %arg4: memref<147x64xbf16, #tpu.memory_space<vmem>>, %arg5: memref<1x64xf32, #tpu.memory_space<vmem>>, %arg6: memref<512x64xbf16, #tpu.memory_space<vmem>>, %arg7: memref<512x64xf32, #tpu.memory_space<vmem>>) attributes {dimension_semantics = [#tpu.dimension_semantics<parallel>, #tpu.dimension_semantics<parallel>, #tpu.dimension_semantics<arbitrary>], iteration_bounds = array<i64: 1, 1, 1>, scalar_prefetch = 0 : i64, scratch_operands = 1 : i64, tpu.core_type = #tpu.core_type<tc>, window_params = [{transform_indices = @transform_0, window_bounds = array<i64: 512, 147>}, {transform_indices = @transform_1, window_bounds = array<i64: 147, 64>}, {transform_indices = @transform_2, window_bounds = array<i64: 1, 64>}, {transform_indices = @transform_3, window_bounds = array<i64: 512, 64>}]} {
    %c0_i32 = arith.constant 0 : i32
    %0 = arith.cmpi eq, %arg2, %c0_i32 : i32
    %1 = arith.extui %0 : i1 to i32
    %c0_i32_0 = arith.constant 0 : i32
    %2 = arith.cmpi ne, %1, %c0_i32_0 : i32
    scf.if %2 {
      %cst_10 = arith.constant 0.000000e+00 : f32
      %12 = vector.broadcast %cst_10 : f32 to vector<512x64xf32>
      %c0_11 = arith.constant 0 : index
      %c0_12 = arith.constant 0 : index
      %13 = vector.load %arg7[%c0_11, %c0_12] : memref<512x64xf32, #tpu.memory_space<vmem>>, vector<512x64xf32>
      tpu.vector_store %arg7[%c0_11, %c0_12], %12 {strides = array<i32>} : memref<512x64xf32, #tpu.memory_space<vmem>>, vector<512x64xf32>,
    } else {
    }
    %c0 = arith.constant 0 : index
    %c0_1 = arith.constant 0 : index
    %3 = vector.load %arg7[%c0, %c0_1] : memref<512x64xf32, #tpu.memory_space<vmem>>, vector<512x64xf32>
    %c0_2 = arith.constant 0 : index
    %c0_3 = arith.constant 0 : index
    %4 = vector.load %arg3[%c0_2, %c0_3] : memref<512x147xbf16, #tpu.memory_space<vmem>>, vector<512x147xbf16>
    %c0_4 = arith.constant 0 : index
    %c0_5 = arith.constant 0 : index
    %5 = vector.load %arg4[%c0_4, %c0_5] : memref<147x64xbf16, #tpu.memory_space<vmem>>, vector<147x64xbf16>
    %cst = arith.constant dense<0.000000e+00> : vector<512x64xf32>
    %6 = tpu.matmul %4, %5, %cst {dimension_numbers = #tpu.dot_dimension_numbers<[1], [0], [0], [1], [0, 0, 1, 1], [], []>} : vector<512x147xbf16>, vector<147x64xbf16>, vector<512x64xf32> -> vector<512x64xf32>
    %7 = arith.addf %3, %6 : vector<512x64xf32>
    %c0_6 = arith.constant 0 : index
    %c0_7 = arith.constant 0 : index
    %8 = vector.load %arg7[%c0_6, %c0_7] : memref<512x64xf32, #tpu.memory_space<vmem>>, vector<512x64xf32>
    tpu.vector_store %arg7[%c0_6, %c0_7], %7 {strides = array<i32>} : memref<512x64xf32, #tpu.memory_space<vmem>>, vector<512x64xf32>,
    %c0_i32_8 = arith.constant 0 : i32
    %9 = arith.cmpi eq, %arg2, %c0_i32_8 : i32
    %10 = arith.extui %9 : i1 to i32
    %c0_i32_9 = arith.constant 0 : i32
    %11 = arith.cmpi ne, %10, %c0_i32_9 : i32
    scf.if %11 {
      %c0_10 = arith.constant 0 : index
      %c0_11 = arith.constant 0 : index
      %12 = vector.load %arg7[%c0_10, %c0_11] : memref<512x64xf32, #tpu.memory_space<vmem>>, vector<512x64xf32>
      %c0_12 = arith.constant 0 : index
      %c0_13 = arith.constant 0 : index
      %13 = vector.load %arg5[%c0_12, %c0_13] : memref<1x64xf32, #tpu.memory_space<vmem>>, vector<1x64xf32>
      %14 = vector.broadcast %13 : vector<1x64xf32> to vector<512x64xf32>
      %15 = arith.addf %12, %14 : vector<512x64xf32>
      %16 = arith.truncf %15 : vector<512x64xf32> to vector<512x64xbf16>
      %c0_14 = arith.constant 0 : index
      %c0_15 = arith.constant 0 : index
      %17 = vector.load %arg6[%c0_14, %c0_15] : memref<512x64xbf16, #tpu.memory_space<vmem>>, vector<512x64xbf16>
      tpu.vector_store %arg6[%c0_14, %c0_15], %16 {strides = array<i32>} : memref<512x64xbf16, #tpu.memory_space<vmem>>, vector<512x64xbf16>,
    } else {
    }
    return
  }
  func.func @transform_0(%arg0: i32, %arg1: i32, %arg2: i32) -> (i32, i32) {
    %c0_i32 = arith.constant 0 : i32
    return %arg0, %arg2 : i32, i32
  }
  func.func @transform_1(%arg0: i32, %arg1: i32, %arg2: i32) -> (i32, i32) {
    %c0_i32 = arith.constant 0 : i32
    return %arg2, %arg1 : i32, i32
  }
  func.func @transform_2(%arg0: i32, %arg1: i32, %arg2: i32) -> (i32, i32) {
    %c0_i32 = arith.constant 0 : i32
    %c0_i32_0 = arith.constant 0 : i32
    return %c0_i32, %arg1 : i32, i32
  }
  func.func @transform_3(%arg0: i32, %arg1: i32, %arg2: i32) -> (i32, i32) {
    %c0_i32 = arith.constant 0 : i32
    return %arg0, %arg1 : i32, i32
  }
}

</mosaic_0001>

<llo_original>
// kernel: tpu_custom_call.1
$region0: #{tpu_custom_call.1}
  #allocation0 [shape = 'u32[]', space=smem, size = 0x4, offset = 0x4, fixed_abs, tag = 'smem constant byte address 0x4 - core index']
  #allocation1 [shape = 'u32[144,128]{1,0:T(1,128)}', space=vmem, size = 0x12000, scoped, tag = 'internal scratch']
  #allocation2 [shape = 'f32[512,64]{1,0:T(8,128)}', space=vmem, size = 0x40000, scoped, tag = 'scratch operand']
  %s0 = inlined_call_operand.vmem [shape: bf16[512,147], index: 0, kind: input, shape index: {}]
  %s1 = inlined_call_operand.vmem [shape: bf16[147,64], index: 1, kind: input, shape index: {}]
  %s2 = inlined_call_operand.vmem [shape: f32[1,64], index: 2, kind: input, shape index: {}]
  %s3 = inlined_call_operand.vmem [shape: bf16[512,64], index: 3, kind: output, shape index: {}]
  %s4 = sld [smem:[#allocation0]]
  $region30: #{tpu_custom_call.1} parent=0
    _
  %s6 = ssub.s32 1, %s4
  %s7 = scalar_select 0, %s6, %s4
  // Predicated region
  $region2: #{tpu_custom_call.1} parent=0 // pred_check
    _
  $region3: #{tpu_custom_call.1} parent=0 // pred_check_branch
    %9 = sbr.rel (0) target = $region5
  $region4: #{tpu_custom_call.1} parent=0 // pred_region
    _
  $region5: #{tpu_custom_call.1} parent=0 // pred_fallthru
    _
  // Predicated region
  $region6: #{tpu_custom_call.1} parent=0 // pred_check
    _
  $region7: #{tpu_custom_call.1} parent=0 // pred_check_branch
    %11 = sbr.rel (0) target = $region9
  $region8: #{tpu_custom_call.1} parent=0 // pred_region
    _
  $region9: #{tpu_custom_call.1} parent=0 // pred_fallthru
    _
  // Predicated region
  $region10: #{tpu_custom_call.1} parent=0 // pred_check
    _
  $region11: #{tpu_custom_call.1} parent=0 // pred_check_branch
    %13 = sbr.rel (0) target = $region13
  $region12: #{tpu_custom_call.1} parent=0 // pred_region
    _
  $region13: #{tpu_custom_call.1} parent=0 // pred_fallthru
    _
  %p15 = scmp.eq.s32.totalorder 0, 0
  // Predicated region
  $region14: #{tpu_custom_call.1} parent=0 // pred_check
    %p16 = pneg %p15
  $region15: #{tpu_custom_call.1} parent=0 // pred_check_branch
    %18 = sbr.rel (%p16) target = $region17
  $region16: #{tpu_custom_call.1} parent=0 // pred_region
    %vm19 = vcmask 523264
    %20 = vst.msk [vmem:[#allocation2] sm:$0xff] %vm19, 0.0
    %21 = vst.msk [vmem:[#allocation2 + $0x8] sm:$0xff] %vm19, 0.0
    %22 = vst.msk [vmem:[#allocation2 + $0x10] sm:$0xff] %vm19, 0.0
    %23 = vst.msk [vmem:[#allocation2 + $0x18] sm:$0xff] %vm19, 0.0
    %24 = vst.msk [vmem:[#allocation2 + $0x20] sm:$0xff] %vm19, 0.0
    %25 = vst.msk [vmem:[#allocation2 + $0x28] sm:$0xff] %vm19, 0.0
    %26 = vst.msk [vmem:[#allocation2 + $0x30] sm:$0xff] %vm19, 0.0
    %27 = vst.msk [vmem:[#allocation2 + $0x38] sm:$0xff] %vm19, 0.0
    %28 = vst.msk [vmem:[#allocation2 + $0x40] sm:$0xff] %vm19, 0.0
    %29 = vst.msk [vmem:[#allocation2 + $0x48] sm:$0xff] %vm19, 0.0
    %30 = vst.msk [vmem:[#allocation2 + $0x50] sm:$0xff] %vm19, 0.0
    %31 = vst.msk [vmem:[#allocation2 + $0x58] sm:$0xff] %vm19, 0.0
    %32 = vst.msk [vmem:[#allocation2 + $0x60] sm:$0xff] %vm19, 0.0
    %33 = vst.msk [vmem:[#allocation2 + $0x68] sm:$0xff] %vm19, 0.0
    %34 = vst.msk [vmem:[#allocation2 + $0x70] sm:$0xff] %vm19, 0.0
    %35 = vst.msk [vmem:[#allocation2 + $0x78] sm:$0xff] %vm19, 0.0
    %36 = vst.msk [vmem:[#allocation2 + $0x80] sm:$0xff] %vm19, 0.0
    %37 = vst.msk [vmem:[#allocation2 + $0x88] sm:$0xff] %vm19, 0.0
    %38 = vst.msk [vmem:[#allocation2 + $0x90] sm:$0xff] %vm19, 0.0
    %39 = vst.msk [vmem:[#allocation2 + $0x98] sm:$0xff] %vm19, 0.0
    %40 = vst.msk [vmem:[#allocation2 + $0xa0] sm:$0xff] %vm19, 0.0
    %41 = vst.msk [vmem:[#allocation2 + $0xa8] sm:$0xff] %vm19, 0.0
    %42 = vst.msk [vmem:[#allocation2 + $0xb0] sm:$0xff] %vm19, 0.0
    %43 = vst.msk [vmem:[#allocation2 + $0xb8] sm:$0xff] %vm19, 0.0
    %44 = vst.msk [vmem:[#allocation2 + $0xc0] sm:$0xff] %vm19, 0.0
    %45 = vst.msk [vmem:[#allocation2 + $0xc8] sm:$0xff] %vm19, 0.0
    %46 = vst.msk [vmem:[#allocation2 + $0xd0] sm:$0xff] %vm19, 0.0
    %47 = vst.msk [vmem:[#allocation2 + $0xd8] sm:$0xff] %vm19, 0.0
    %48 = vst.msk [vmem:[#allocation2 + $0xe0] sm:$0xff] %vm19, 0.0
    %49 = vst.msk [vmem:[#allocation2 + $0xe8] sm:$0xff] %vm19, 0.0
    %50 = vst.msk [vmem:[#allocation2 + $0xf0] sm:$0xff] %vm19, 0.0
    %51 = vst.msk [vmem:[#allocation2 + $0xf8] sm:$0xff] %vm19, 0.0
    %52 = vst.msk [vmem:[#allocation2 + $0x100] sm:$0xff] %vm19, 0.0
    %53 = vst.msk [vmem:[#allocation2 + $0x108] sm:$0xff] %vm19, 0.0
    %54 = vst.msk [vmem:[#allocation2 + $0x110] sm:$0xff] %vm19, 0.0
    %55 = vst.msk [vmem:[#allocation2 + $0x118] sm:$0xff] %vm19, 0.0
    %56 = vst.msk [vmem:[#allocation2 + $0x120] sm:$0xff] %vm19, 0.0
    %57 = vst.msk [vmem:[#allocation2 + $0x128] sm:$0xff] %vm19, 0.0
    %58 = vst.msk [vmem:[#allocation2 + $0x130] sm:$0xff] %vm19, 0.0
    %59 = vst.msk [vmem:[#allocation2 + $0x138] sm:$0xff] %vm19, 0.0
    %60 = vst.msk [vmem:[#allocation2 + $0x140] sm:$0xff] %vm19, 0.0
    %61 = vst.msk [vmem:[#allocation2 + $0x148] sm:$0xff] %vm19, 0.0
    %62 = vst.msk [vmem:[#allocation2 + $0x150] sm:$0xff] %vm19, 0.0
    %63 = vst.msk [vmem:[#allocation2 + $0x158] sm:$0xff] %vm19, 0.0
    %64 = vst.msk [vmem:[#allocation2 + $0x160] sm:$0xff] %vm19, 0.0
    %65 = vst.msk [vmem:[#allocation2 + $0x168] sm:$0xff] %vm19, 0.0
    %66 = vst.msk [vmem:[#allocation2 + $0x170] sm:$0xff] %vm19, 0.0
    %67 = vst.msk [vmem:[#allocation2 + $0x178] sm:$0xff] %vm19, 0.0
    %68 = vst.msk [vmem:[#allocation2 + $0x180] sm:$0xff] %vm19, 0.0
    %69 = vst.msk [vmem:[#allocation2 + $0x188] sm:$0xff] %vm19, 0.0
    %70 = vst.msk [vmem:[#allocation2 + $0x190] sm:$0xff] %vm19, 0.0
    %71 = vst.msk [vmem:[#allocation2 + $0x198] sm:$0xff] %vm19, 0.0
    %72 = vst.msk [vmem:[#allocation2 + $0x1a0] sm:$0xff] %vm19, 0.0
    %73 = vst.msk [vmem:[#allocation2 + $0x1a8] sm:$0xff] %vm19, 0.0
    %74 = vst.msk [vmem:[#allocation2 + $0x1b0] sm:$0xff] %vm19, 0.0
    %75 = vst.msk [vmem:[#allocation2 + $0x1b8] sm:$0xff] %vm19, 0.0
    %76 = vst.msk [vmem:[#allocation2 + $0x1c0] sm:$0xff] %vm19, 0.0
    %77 = vst.msk [vmem:[#allocation2 + $0x1c8] sm:$0xff] %vm19, 0.0
    %78 = vst.msk [vmem:[#allocation2 + $0x1d0] sm:$0xff] %vm19, 0.0
    %79 = vst.msk [vmem:[#allocation2 + $0x1d8] sm:$0xff] %vm19, 0.0
    %80 = vst.msk [vmem:[#allocation2 + $0x1e0] sm:$0xff] %vm19, 0.0
    %81 = vst.msk [vmem:[#allocation2 + $0x1e8] sm:$0xff] %vm19, 0.0
    %82 = vst.msk [vmem:[#allocation2 + $0x1f0] sm:$0xff] %vm19, 0.0
    %83 = vst.msk [vmem:[#allocation2 + $0x1f8] sm:$0xff] %vm19, 0.0
  $region17: #{tpu_custom_call.1} parent=0 // pred_fallthru
    _
  %v84 = vld [vmem:[#allocation2] sm:$0xff]
  %v85 = vld [vmem:[#allocation2 + $0x8] sm:$0xff]
  %v86 = vld [vmem:[#allocation2 + $0x10] sm:$0xff]
  %v87 = vld [vmem:[#allocation2 + $0x18] sm:$0xff]
  %v88 = vld [vmem:[#allocation2 + $0x20] sm:$0xff]
  %v89 = vld [vmem:[#allocation2 + $0x28] sm:$0xff]
  %v90 = vld [vmem:[#allocation2 + $0x30] sm:$0xff]
  %v91 = vld [vmem:[#allocation2 + $0x38] sm:$0xff]
  %v92 = vld [vmem:[#allocation2 + $0x40] sm:$0xff]
  %v93 = vld [vmem:[#allocation2 + $0x48] sm:$0xff]
  %v94 = vld [vmem:[#allocation2 + $0x50] sm:$0xff]
  %v95 = vld [vmem:[#allocation2 + $0x58] sm:$0xff]
  %v96 = vld [vmem:[#allocation2 + $0x60] sm:$0xff]
  %v97 = vld [vmem:[#allocation2 + $0x68] sm:$0xff]
  %v98 = vld [vmem:[#allocation2 + $0x70] sm:$0xff]
  %v99 = vld [vmem:[#allocation2 + $0x78] sm:$0xff]
  %v100 = vld [vmem:[#allocation2 + $0x80] sm:$0xff]
  %v101 = vld [vmem:[#allocation2 + $0x88] sm:$0xff]
  %v102 = vld [vmem:[#allocation2 + $0x90] sm:$0xff]
  %v103 = vld [vmem:[#allocation2 + $0x98] sm:$0xff]
  %v104 = vld [vmem:[#allocation2 + $0xa0] sm:$0xff]
  %v105 = vld [vmem:[#allocation2 + $0xa8] sm:$0xff]
  %v106 = vld [vmem:[#allocation2 + $0xb0] sm:$0xff]
  %v107 = vld [vmem:[#allocation2 + $0xb8] sm:$0xff]
  %v108 = vld [vmem:[#allocation2 + $0xc0] sm:$0xff]
  %v109 = vld [vmem:[#allocation2 + $0xc8] sm:$0xff]
  %v110 = vld [vmem:[#allocation2 + $0xd0] sm:$0xff]
  %v111 = vld [vmem:[#allocation2 + $0xd8] sm:$0xff]
  %v112 = vld [vmem:[#allocation2 + $0xe0] sm:$0xff]
  %v113 = vld [vmem:[#allocation2 + $0xe8] sm:$0xff]
  %v114 = vld [vmem:[#allocation2 + $0xf0] sm:$0xff]
  %v115 = vld [vmem:[#allocation2 + $0xf8] sm:$0xff]
  %v116 = vld [vmem:[#allocation2 + $0x100] sm:$0xff]
  %v117 = vld [vmem:[#allocation2 + $0x108] sm:$0xff]
  %v118 = vld [vmem:[#allocation2 + $0x110] sm:$0xff]
  %v119 = vld [vmem:[#allocation2 + $0x118] sm:$0xff]
  %v120 = vld [vmem:[#allocation2 + $0x120] sm:$0xff]
  %v121 = vld [vmem:[#allocation2 + $0x128] sm:$0xff]
  %v122 = vld [vmem:[#allocation2 + $0x130] sm:$0xff]
  %v123 = vld [vmem:[#allocation2 + $0x138] sm:$0xff]
  %v124 = vld [vmem:[#allocation2 + $0x140] sm:$0xff]
  %v125 = vld [vmem:[#allocation2 + $0x148] sm:$0xff]
  %v126 = vld [vmem:[#allocation2 + $0x150] sm:$0xff]
  %v127 = vld [vmem:[#allocation2 + $0x158] sm:$0xff]
  %v128 = vld [vmem:[#allocation2 + $0x160] sm:$0xff]
  %v129 = vld [vmem:[#allocation2 + $0x168] sm:$0xff]
  %v130 = vld [vmem:[#allocation2 + $0x170] sm:$0xff]
  %v131 = vld [vmem:[#allocation2 + $0x178] sm:$0xff]
  %v132 = vld [vmem:[#allocation2 + $0x180] sm:$0xff]
  %v133 = vld [vmem:[#allocation2 + $0x188] sm:$0xff]
  %v134 = vld [vmem:[#allocation2 + $0x190] sm:$0xff]
  %v135 = vld [vmem:[#allocation2 + $0x198] sm:$0xff]
  %v136 = vld [vmem:[#allocation2 + $0x1a0] sm:$0xff]
  %v137 = vld [vmem:[#allocation2 + $0x1a8] sm:$0xff]
  %v138 = vld [vmem:[#allocation2 + $0x1b0] sm:$0xff]
  %v139 = vld [vmem:[#allocation2 + $0x1b8] sm:$0xff]
  %v140 = vld [vmem:[#allocation2 + $0x1c0] sm:$0xff]
  %v141 = vld [vmem:[#allocation2 + $0x1c8] sm:$0xff]
  %v142 = vld [vmem:[#allocation2 + $0x1d0] sm:$0xff]
  %v143 = vld [vmem:[#allocation2 + $0x1d8] sm:$0xff]
  %v144 = vld [vmem:[#allocation2 + $0x1e0] sm:$0xff]
  %v145 = vld [vmem:[#allocation2 + $0x1e8] sm:$0xff]
  %v146 = vld [vmem:[#allocation2 + $0x1f0] sm:$0xff]
  %v147 = vld [vmem:[#allocation2 + $0x1f8] sm:$0xff]
  %v148 = vld [vmem:[%s0] sm:$0xff]
  %v149 = vld [vmem:[%s0 + $0x8] sm:$0xff]
  %v150 = vld [vmem:[%s0 + $0x10] sm:$0xff]
  %v151 = vld [vmem:[%s0 + $0x18] sm:$0xff]
  %v152 = vld [vmem:[%s0 + $0x20] sm:$0xff]
  %v153 = vld [vmem:[%s0 + $0x28] sm:$0xff]
  %v154 = vld [vmem:[%s0 + $0x30] sm:$0xff]
  %v155 = vld [vmem:[%s0 + $0x38] sm:$0xff]
  %v156 = vld [vmem:[%s0 + $0x40] sm:$0xff]
  %v157 = vld [vmem:[%s0 + $0x48] sm:$0xff]
  %v158 = vld [vmem:[%s0 + $0x50] sm:$0xff]
  %v159 = vld [vmem:[%s0 + $0x58] sm:$0xff]
  %v160 = vld [vmem:[%s0 + $0x60] sm:$0xff]
  %v161 = vld [vmem:[%s0 + $0x68] sm:$0xff]
  %v162 = vld [vmem:[%s0 + $0x70] sm:$0xff]
  %v163 = vld [vmem:[%s0 + $0x78] sm:$0xff]
  %v164 = vld [vmem:[%s0 + $0x80] sm:$0xff]
  %v165 = vld [vmem:[%s0 + $0x88] sm:$0xff]
  %v166 = vld [vmem:[%s0 + $0x90] sm:$0xff]
  %v167 = vld [vmem:[%s0 + $0x98] sm:$0xff]
  %v168 = vld [vmem:[%s0 + $0xa0] sm:$0xff]
  %v169 = vld [vmem:[%s0 + $0xa8] sm:$0xff]
  %v170 = vld [vmem:[%s0 + $0xb0] sm:$0xff]
  %v171 = vld [vmem:[%s0 + $0xb8] sm:$0xff]
  %v172 = vld [vmem:[%s0 + $0xc0] sm:$0xff]
  %v173 = vld [vmem:[%s0 + $0xc8] sm:$0xff]
  %v174 = vld [vmem:[%s0 + $0xd0] sm:$0xff]
  %v175 = vld [vmem:[%s0 + $0xd8] sm:$0xff]
  %v176 = vld [vmem:[%s0 + $0xe0] sm:$0xff]
  %v177 = vld [vmem:[%s0 + $0xe8] sm:$0xff]
  %v178 = vld [vmem:[%s0 + $0xf0] sm:$0xff]
  %v179 = vld [vmem:[%s0 + $0xf8] sm:$0xff]
  %v180 = vld [vmem:[%s0 + $0x100] sm:$0xff]
  %v181 = vld [vmem:[%s0 + $0x108] sm:$0xff]
  %v182 = vld [vmem:[%s0 + $0x110] sm:$0xff]
  %v183 = vld [vmem:[%s0 + $0x118] sm:$0xff]
  %v184 = vld [vmem:[%s0 + $0x120] sm:$0xff]
  %v185 = vld [vmem:[%s0 + $0x128] sm:$0xff]
  %v186 = vld [vmem:[%s0 + $0x130] sm:$0xff]
  %v187 = vld [vmem:[%s0 + $0x138] sm:$0xff]
  %v188 = vld [vmem:[%s0 + $0x140] sm:$0xff]
  %v189 = vld [vmem:[%s0 + $0x148] sm:$0xff]
  %v190 = vld [vmem:[%s0 + $0x150] sm:$0xff]
  %v191 = vld [vmem:[%s0 + $0x158] sm:$0xff]
  %v192 = vld [vmem:[%s0 + $0x160] sm:$0xff]
  %v193 = vld [vmem:[%s0 + $0x168] sm:$0xff]
  %v194 = vld [vmem:[%s0 + $0x170] sm:$0xff]
  %v195 = vld [vmem:[%s0 + $0x178] sm:$0xff]
  %v196 = vld [vmem:[%s0 + $0x180] sm:$0xff]
  %v197 = vld [vmem:[%s0 + $0x188] sm:$0xff]
  %v198 = vld [vmem:[%s0 + $0x190] sm:$0xff]
  %v199 = vld [vmem:[%s0 + $0x198] sm:$0xff]
  %v200 = vld [vmem:[%s0 + $0x1a0] sm:$0xff]
  %v201 = vld [vmem:[%s0 + $0x1a8] sm:$0xff]
  %v202 = vld [vmem:[%s0 + $0x1b0] sm:$0xff]
  %v203 = vld [vmem:[%s0 + $0x1b8] sm:$0xff]
  %v204 = vld [vmem:[%s0 + $0x1c0] sm:$0xff]
  %v205 = vld [vmem:[%s0 + $0x1c8] sm:$0xff]
  %v206 = vld [vmem:[%s0 + $0x1d0] sm:$0xff]
  %v207 = vld [vmem:[%s0 + $0x1d8] sm:$0xff]
  %v208 = vld [vmem:[%s0 + $0x1e0] sm:$0xff]
  %v209 = vld [vmem:[%s0 + $0x1e8] sm:$0xff]
  %v210 = vld [vmem:[%s0 + $0x1f0] sm:$0xff]
  %v211 = vld [vmem:[%s0 + $0x1f8] sm:$0xff]
  %v212 = vld [vmem:[%s1] sm:$0xf]
  %v213 = vld [vmem:[%s1 + $0x4] sm:$0xf]
  %v214 = vld [vmem:[%s1 + $0x8] sm:$0xf]
  %v215 = vld [vmem:[%s1 + $0xc] sm:$0xf]
  %v216 = vld [vmem:[%s1 + $0x10] sm:$0xf]
  %v217 = vld [vmem:[%s1 + $0x14] sm:$0xf]
  %v218 = vld [vmem:[%s1 + $0x18] sm:$0xf]
  %v219 = vld [vmem:[%s1 + $0x1c] sm:$0xf]
  %v220 = vld [vmem:[%s1 + $0x20] sm:$0xf]
  %v221 = vld [vmem:[%s1 + $0x24] sm:$0xf]
  %v222 = vld [vmem:[%s1 + $0x28] sm:$0xf]
  %v223 = vld [vmem:[%s1 + $0x2c] sm:$0xf]
  %v224 = vld [vmem:[%s1 + $0x30] sm:$0xf]
  %v225 = vld [vmem:[%s1 + $0x34] sm:$0xf]
  %v226 = vld [vmem:[%s1 + $0x38] sm:$0xf]
  %v227 = vld [vmem:[%s1 + $0x3c] sm:$0xf]
  %v228 = vld [vmem:[%s1 + $0x40] sm:$0xf]
  %v229 = vld [vmem:[%s1 + $0x44] sm:$0xf]
  %v230 = vld [vmem:[%s1 + $0x48] sm:$0x3]
  %v295 = vunpack.c.l.b16 %v148
  %v296 = vunpack.c.h.b16 %v148
  %v297 = vunpack.c.l.b16 %v149
  %v298 = vunpack.c.h.b16 %v149
  %v299 = vunpack.c.l.b16 %v150
  %v300 = vunpack.c.h.b16 %v150
  %v301 = vunpack.c.l.b16 %v151
  %v302 = vunpack.c.h.b16 %v151
  %v303 = vunpack.c.l.b16 %v152
  %v304 = vunpack.c.h.b16 %v152
  %v305 = vunpack.c.l.b16 %v153
  %v306 = vunpack.c.h.b16 %v153
  %v307 = vunpack.c.l.b16 %v154
  %v308 = vunpack.c.h.b16 %v154
  %v309 = vunpack.c.l.b16 %v155
  %v310 = vunpack.c.h.b16 %v155
  %v311 = vunpack.c.l.b16 %v156
  %v312 = vunpack.c.h.b16 %v156
  %v313 = vunpack.c.l.b16 %v157
  %v314 = vunpack.c.h.b16 %v157
  %v315 = vunpack.c.l.b16 %v158
  %v316 = vunpack.c.h.b16 %v158
  %v317 = vunpack.c.l.b16 %v159
  %v318 = vunpack.c.h.b16 %v159
  %v319 = vunpack.c.l.b16 %v160
  %v320 = vunpack.c.h.b16 %v160
  %v321 = vunpack.c.l.b16 %v161
  %v322 = vunpack.c.h.b16 %v161
  %v323 = vunpack.c.l.b16 %v162
  %v324 = vunpack.c.h.b16 %v162
  %v325 = vunpack.c.l.b16 %v163
  %v326 = vunpack.c.h.b16 %v163
  %v327 = vunpack.c.l.b16 %v164
  %v328 = vunpack.c.h.b16 %v164
  %v329 = vunpack.c.l.b16 %v165
  %v330 = vunpack.c.h.b16 %v165
  %v331 = vunpack.c.l.b16 %v166
  %v332 = vunpack.c.h.b16 %v166
  %v333 = vunpack.c.l.b16 %v167
  %v334 = vunpack.c.h.b16 %v167
  %v335 = vunpack.c.l.b16 %v168
  %v336 = vunpack.c.h.b16 %v168
  %v337 = vunpack.c.l.b16 %v169
  %v338 = vunpack.c.h.b16 %v169
  %v339 = vunpack.c.l.b16 %v170
  %v340 = vunpack.c.h.b16 %v170
  %v341 = vunpack.c.l.b16 %v171
  %v342 = vunpack.c.h.b16 %v171
  %v343 = vunpack.c.l.b16 %v172
  %v344 = vunpack.c.h.b16 %v172
  %v345 = vunpack.c.l.b16 %v173
  %v346 = vunpack.c.h.b16 %v173
  %v347 = vunpack.c.l.b16 %v174
  %v348 = vunpack.c.h.b16 %v174
  %v349 = vunpack.c.l.b16 %v175
  %v350 = vunpack.c.h.b16 %v175
  %v351 = vunpack.c.l.b16 %v176
  %v352 = vunpack.c.h.b16 %v176
  %v353 = vunpack.c.l.b16 %v177
  %v354 = vunpack.c.h.b16 %v177
  %v355 = vunpack.c.l.b16 %v178
  %v356 = vunpack.c.h.b16 %v178
  %v357 = vunpack.c.l.b16 %v179
  %v358 = vunpack.c.h.b16 %v179
  %v359 = vunpack.c.l.b16 %v180
  %v360 = vunpack.c.h.b16 %v180
  %v361 = vunpack.c.l.b16 %v181
  %v362 = vunpack.c.h.b16 %v181
  %v363 = vunpack.c.l.b16 %v182
  %v364 = vunpack.c.h.b16 %v182
  %v365 = vunpack.c.l.b16 %v183
  %v366 = vunpack.c.h.b16 %v183
  %v367 = vunpack.c.l.b16 %v184
  %v368 = vunpack.c.h.b16 %v184
  %v369 = vunpack.c.l.b16 %v185
  %v370 = vunpack.c.h.b16 %v185
  %v371 = vunpack.c.l.b16 %v186
  %v372 = vunpack.c.h.b16 %v186
  %v373 = vunpack.c.l.b16 %v187
  %v374 = vunpack.c.h.b16 %v187
  %v375 = vunpack.c.l.b16 %v188
  %v376 = vunpack.c.h.b16 %v188
  %v377 = vunpack.c.l.b16 %v189
  %v378 = vunpack.c.h.b16 %v189
  %v379 = vunpack.c.l.b16 %v190
  %v380 = vunpack.c.h.b16 %v190
  %v381 = vunpack.c.l.b16 %v191
  %v382 = vunpack.c.h.b16 %v191
  %v383 = vunpack.c.l.b16 %v192
  %v384 = vunpack.c.h.b16 %v192
  %v385 = vunpack.c.l.b16 %v193
  %v386 = vunpack.c.h.b16 %v193
  %v387 = vunpack.c.l.b16 %v194
  %v388 = vunpack.c.h.b16 %v194
  %v389 = vunpack.c.l.b16 %v195
  %v390 = vunpack.c.h.b16 %v195
  %v391 = vunpack.c.l.b16 %v196
  %v392 = vunpack.c.h.b16 %v196
  %v393 = vunpack.c.l.b16 %v197
  %v394 = vunpack.c.h.b16 %v197
  %v395 = vunpack.c.l.b16 %v198
  %v396 = vunpack.c.h.b16 %v198
  %v397 = vunpack.c.l.b16 %v199
  %v398 = vunpack.c.h.b16 %v199
  %v399 = vunpack.c.l.b16 %v200
  %v400 = vunpack.c.h.b16 %v200
  %v401 = vunpack.c.l.b16 %v201
  %v402 = vunpack.c.h.b16 %v201
  %v403 = vunpack.c.l.b16 %v202
  %v404 = vunpack.c.h.b16 %v202
  %v405 = vunpack.c.l.b16 %v203
  %v406 = vunpack.c.h.b16 %v203
  %v407 = vunpack.c.l.b16 %v204
  %v408 = vunpack.c.h.b16 %v204
  %v409 = vunpack.c.l.b16 %v205
  %v410 = vunpack.c.h.b16 %v205
  %v411 = vunpack.c.l.b16 %v206
  %v412 = vunpack.c.h.b16 %v206
  %v413 = vunpack.c.l.b16 %v207
  %v414 = vunpack.c.h.b16 %v207
  %v415 = vunpack.c.l.b16 %v208
  %v416 = vunpack.c.h.b16 %v208
  %v417 = vunpack.c.l.b16 %v209
  %v418 = vunpack.c.h.b16 %v209
  %v419 = vunpack.c.l.b16 %v210
  %v420 = vunpack.c.h.b16 %v210
  %v421 = vunpack.c.l.b16 %v211
  %v422 = vunpack.c.h.b16 %v211
  %v423 = vpack.c.b16 %v297, %v295
  %v424 = vpack.c.b16 %v298, %v296
  %v425 = vpack.c.b16 %v301, %v299
  %v426 = vpack.c.b16 %v302, %v300
  %v427 = vpack.c.b16 %v305, %v303
  %v428 = vpack.c.b16 %v306, %v304
  %v429 = vpack.c.b16 %v309, %v307
  %v430 = vpack.c.b16 %v310, %v308
  %v431 = vpack.c.b16 %v313, %v311
  %v432 = vpack.c.b16 %v314, %v312
  %v433 = vpack.c.b16 %v317, %v315
  %v434 = vpack.c.b16 %v318, %v316
  %v435 = vpack.c.b16 %v321, %v319
  %v436 = vpack.c.b16 %v322, %v320
  %v437 = vpack.c.b16 %v325, %v323
  %v438 = vpack.c.b16 %v326, %v324
  %v439 = vpack.c.b16 %v329, %v327
  %v440 = vpack.c.b16 %v330, %v328
  %v441 = vpack.c.b16 %v333, %v331
  %v442 = vpack.c.b16 %v334, %v332
  %v443 = vpack.c.b16 %v337, %v335
  %v444 = vpack.c.b16 %v338, %v336
  %v445 = vpack.c.b16 %v341, %v339
  %v446 = vpack.c.b16 %v342, %v340
  %v447 = vpack.c.b16 %v345, %v343
  %v448 = vpack.c.b16 %v346, %v344
  %v449 = vpack.c.b16 %v349, %v347
  %v450 = vpack.c.b16 %v350, %v348
  %v451 = vpack.c.b16 %v353, %v351
  %v452 = vpack.c.b16 %v354, %v352
  %v453 = vpack.c.b16 %v357, %v355
  %v454 = vpack.c.b16 %v358, %v356
  %v455 = vpack.c.b16 %v361, %v359
  %v456 = vpack.c.b16 %v362, %v360
  %v457 = vpack.c.b16 %v365, %v363
  %v458 = vpack.c.b16 %v366, %v364
  %v459 = vpack.c.b16 %v369, %v367
  %v460 = vpack.c.b16 %v370, %v368
  %v461 = vpack.c.b16 %v373, %v371
  %v462 = vpack.c.b16 %v374, %v372
  %v463 = vpack.c.b16 %v377, %v375
  %v464 = vpack.c.b16 %v378, %v376
  %v465 = vpack.c.b16 %v381, %v379
  %v466 = vpack.c.b16 %v382, %v380
  %v467 = vpack.c.b16 %v385, %v383
  %v468 = vpack.c.b16 %v386, %v384
  %v469 = vpack.c.b16 %v389, %v387
  %v470 = vpack.c.b16 %v390, %v388
  %v471 = vpack.c.b16 %v393, %v391
  %v472 = vpack.c.b16 %v394, %v392
  %v473 = vpack.c.b16 %v397, %v395
  %v474 = vpack.c.b16 %v398, %v396
  %v475 = vpack.c.b16 %v401, %v399
  %v476 = vpack.c.b16 %v402, %v400
  %v477 = vpack.c.b16 %v405, %v403
  %v478 = vpack.c.b16 %v406, %v404
  %v479 = vpack.c.b16 %v409, %v407
  %v480 = vpack.c.b16 %v410, %v408
  %v481 = vpack.c.b16 %v413, %v411
  %v482 = vpack.c.b16 %v414, %v412
  %v483 = vpack.c.b16 %v417, %v415
  %v484 = vpack.c.b16 %v418, %v416
  %v485 = vpack.c.b16 %v421, %v419
  %v486 = vpack.c.b16 %v422, %v420
  %v538 = vunpack.c.l.b16 %v212
  %v539 = vunpack.c.l.b16 %v213
  %v540 = vunpack.c.l.b16 %v214
  %v541 = vunpack.c.l.b16 %v215
  %v542 = vunpack.c.l.b16 %v216
  %v543 = vunpack.c.l.b16 %v217
  %v544 = vunpack.c.l.b16 %v218
  %v545 = vunpack.c.l.b16 %v219
  %v546 = vunpack.c.l.b16 %v220
  %v547 = vunpack.c.l.b16 %v221
  %v548 = vunpack.c.l.b16 %v222
  %v549 = vunpack.c.l.b16 %v223
  %v550 = vunpack.c.l.b16 %v224
  %v551 = vunpack.c.l.b16 %v225
  %v552 = vunpack.c.l.b16 %v226
  %v553 = vunpack.c.l.b16 %v227
  %v554 = vunpack.c.l.b16 %v228
  %v555 = vunpack.c.l.b16 %v229
  %v556 = vunpack.c.l.b16 %v230
  %v557 = vpack.c.b16 %v539, %v538
  %v558 = vpack.c.b16 %v541, %v540
  %v559 = vpack.c.b16 %v543, %v542
  %v560 = vpack.c.b16 %v545, %v544
  %v561 = vpack.c.b16 %v547, %v546
  %v562 = vpack.c.b16 %v549, %v548
  %v563 = vpack.c.b16 %v551, %v550
  %v564 = vpack.c.b16 %v553, %v552
  %v565 = vpack.c.b16 %v555, %v554
  %v566 = vpack.c.b16 %v556, %v556
  %vm576 = vcmask 154624
  %v578 = vsel %vm576, %v424, 0
  %v581 = vsel %vm576, %v426, 0
  %v584 = vsel %vm576, %v428, 0
  %v587 = vsel %vm576, %v430, 0
  %v590 = vsel %vm576, %v432, 0
  %v593 = vsel %vm576, %v434, 0
  %v596 = vsel %vm576, %v436, 0
  %v599 = vsel %vm576, %v438, 0
  %v602 = vsel %vm576, %v440, 0
  %v605 = vsel %vm576, %v442, 0
  %v608 = vsel %vm576, %v444, 0
  %v611 = vsel %vm576, %v446, 0
  %v614 = vsel %vm576, %v448, 0
  %v617 = vsel %vm576, %v450, 0
  %v620 = vsel %vm576, %v452, 0
  %v623 = vsel %vm576, %v454, 0
  %v626 = vsel %vm576, %v456, 0
  %v629 = vsel %vm576, %v458, 0
  %v632 = vsel %vm576, %v460, 0
  %v635 = vsel %vm576, %v462, 0
  %v638 = vsel %vm576, %v464, 0
  %v641 = vsel %vm576, %v466, 0
  %v644 = vsel %vm576, %v468, 0
  %v647 = vsel %vm576, %v470, 0
  %v650 = vsel %vm576, %v472, 0
  %v653 = vsel %vm576, %v474, 0
  %v656 = vsel %vm576, %v476, 0
  %v659 = vsel %vm576, %v478, 0
  %v662 = vsel %vm576, %v480, 0
  %v665 = vsel %vm576, %v482, 0
  %v668 = vsel %vm576, %v484, 0
  %v671 = vsel %vm576, %v486, 0
  %vm673 = vcmask 1040384
  %vm674 = vcmask 1041408
  %v675 = vsel %vm673, 4294967295, 65535
  %v676 = vsel %vm674, %v675, 0
  %v678 = vand.u32 %v566, %v676
  %680 = vmatprep.subr.bf16.mxu0 0
  %681 = vmatpush1.bf16.msra.mxu0 %v564
  %682 = vmatprep.subr.bf16.mxu0 0
  %683 = vmatpush1.bf16.msra.mxu0 %v563
  %684 = vmatprep.subr.bf16.mxu0 0
  %685 = vmatpush1.bf16.msra.mxu0 %v562
  %686 = vmatprep.subr.bf16.mxu0 0
  %687 = vmatpush1.bf16.msra.mxu0 %v561
  %688 = vmatprep.subr.bf16.mxu0 0
  %689 = vmatpush1.bf16.msra.mxu0 %v560
  %690 = vmatprep.subr.bf16.mxu0 0
  %691 = vmatpush1.bf16.msra.mxu0 %v559
  %692 = vmatprep.subr.bf16.mxu0 0
  %693 = vmatpush1.bf16.msra.mxu0 %v558
  %694 = vmatprep.subr.bf16.mxu0 0
  %695 = vmatpush1.bf16.msra.mxu0 %v557
  %696 = vmatprep.subr.bf16.mxu0 0
  %697 = vmatpush2.bf16.msra.mxu0 0
  %698 = vmatprep.subr.bf16.mxu0 0
  %699 = vmatpush2.bf16.msra.mxu0 0
  %700 = vmatprep.subr.bf16.mxu0 0
  %701 = vmatpush2.bf16.msra.mxu0 0
  %702 = vmatprep.subr.bf16.mxu0 0
  %703 = vmatpush2.bf16.msra.mxu0 0
  %704 = vmatprep.subr.bf16.mxu0 0
  %705 = vmatpush2.bf16.msra.mxu0 0
  %706 = vmatprep.subr.bf16.mxu0 0
  %707 = vmatpush2.bf16.msra.mxu0 0
  %708 = vmatprep.subr.bf16.mxu0 0
  %709 = vmatpush2.bf16.msra.mxu0 %v678
  %710 = vmatprep.subr.bf16.mxu0 0
  %711 = vmatpush2.bf16.msra.mxu0 %v565
  %712 = vmatprep.mubr.bf16.mxu0 %v578
  %713 = vmatmul.mubr.bf16.gmra.mxu0 %v423
  %v714 = vpop.f32.mrf.mxu0
  %v715 = vadd.f32 0.0, %v714
  %v716 = vpop.f32.mrf.mxu0
  %v717 = vpop.f32.mrf.mxu0
  %v718 = vadd.f32 0.0, %v717
  %v719 = vpop.f32.mrf.mxu0
  %720 = vmatprep.mubr.bf16.mxu0 %v581
  %721 = vmatmul.mubr.bf16.gmra.mxu0 %v425
  %v722 = vpop.f32.mrf.mxu0
  %v723 = vadd.f32 0.0, %v722
  %v724 = vpop.f32.mrf.mxu0
  %v725 = vpop.f32.mrf.mxu0
  %v726 = vadd.f32 0.0, %v725
  %v727 = vpop.f32.mrf.mxu0
  %728 = vmatprep.mubr.bf16.mxu0 %v584
  %729 = vmatmul.mubr.bf16.gmra.mxu0 %v427
  %v730 = vpop.f32.mrf.mxu0
  %v731 = vadd.f32 0.0, %v730
  %v732 = vpop.f32.mrf.mxu0
  %v733 = vpop.f32.mrf.mxu0
  %v734 = vadd.f32 0.0, %v733
  %v735 = vpop.f32.mrf.mxu0
  %736 = vmatprep.mubr.bf16.mxu0 %v587
  %737 = vmatmul.mubr.bf16.gmra.mxu0 %v429
  %v738 = vpop.f32.mrf.mxu0
  %v739 = vadd.f32 0.0, %v738
  %v740 = vpop.f32.mrf.mxu0
  %v741 = vpop.f32.mrf.mxu0
  %v742 = vadd.f32 0.0, %v741
  %v743 = vpop.f32.mrf.mxu0
  %744 = vmatprep.mubr.bf16.mxu0 %v590
  %745 = vmatmul.mubr.bf16.gmra.mxu0 %v431
  %v746 = vpop.f32.mrf.mxu0
  %v747 = vadd.f32 0.0, %v746
  %v748 = vpop.f32.mrf.mxu0
  %v749 = vpop.f32.mrf.mxu0
  %v750 = vadd.f32 0.0, %v749
  %v751 = vpop.f32.mrf.mxu0
  %752 = vmatprep.mubr.bf16.mxu0 %v593
  %753 = vmatmul.mubr.bf16.gmra.mxu0 %v433
  %v754 = vpop.f32.mrf.mxu0
  %v755 = vadd.f32 0.0, %v754
  %v756 = vpop.f32.mrf.mxu0
  %v757 = vpop.f32.mrf.mxu0
  %v758 = vadd.f32 0.0, %v757
  %v759 = vpop.f32.mrf.mxu0
  %760 = vmatprep.mubr.bf16.mxu0 %v596
  %761 = vmatmul.mubr.bf16.gmra.mxu0 %v435
  %v762 = vpop.f32.mrf.mxu0
  %v763 = vadd.f32 0.0, %v762
  %v764 = vpop.f32.mrf.mxu0
  %v765 = vpop.f32.mrf.mxu0
  %v766 = vadd.f32 0.0, %v765
  %v767 = vpop.f32.mrf.mxu0
  %768 = vmatprep.mubr.bf16.mxu0 %v599
  %769 = vmatmul.mubr.bf16.gmra.mxu0 %v437
  %v770 = vpop.f32.mrf.mxu0
  %v771 = vadd.f32 0.0, %v770
  %v772 = vpop.f32.mrf.mxu0
  %v773 = vpop.f32.mrf.mxu0
  %v774 = vadd.f32 0.0, %v773
  %v775 = vpop.f32.mrf.mxu0
  %776 = vmatprep.mubr.bf16.mxu0 %v602
  %777 = vmatmul.mubr.bf16.gmra.mxu0 %v439
  %v778 = vpop.f32.mrf.mxu0
  %v779 = vadd.f32 0.0, %v778
  %v780 = vpop.f32.mrf.mxu0
  %v781 = vpop.f32.mrf.mxu0
  %v782 = vadd.f32 0.0, %v781
  %v783 = vpop.f32.mrf.mxu0
  %784 = vmatprep.mubr.bf16.mxu0 %v605
  %785 = vmatmul.mubr.bf16.gmra.mxu0 %v441
  %v786 = vpop.f32.mrf.mxu0
  %v787 = vadd.f32 0.0, %v786
  %v788 = vpop.f32.mrf.mxu0
  %v789 = vpop.f32.mrf.mxu0
  %v790 = vadd.f32 0.0, %v789
  %v791 = vpop.f32.mrf.mxu0
  %792 = vmatprep.mubr.bf16.mxu0 %v608
  %793 = vmatmul.mubr.bf16.gmra.mxu0 %v443
  %v794 = vpop.f32.mrf.mxu0
  %v795 = vadd.f32 0.0, %v794
  %v796 = vpop.f32.mrf.mxu0
  %v797 = vpop.f32.mrf.mxu0
  %v798 = vadd.f32 0.0, %v797
  %v799 = vpop.f32.mrf.mxu0
  %800 = vmatprep.mubr.bf16.mxu0 %v611
  %801 = vmatmul.mubr.bf16.gmra.mxu0 %v445
  %v802 = vpop.f32.mrf.mxu0
  %v803 = vadd.f32 0.0, %v802
  %v804 = vpop.f32.mrf.mxu0
  %v805 = vpop.f32.mrf.mxu0
  %v806 = vadd.f32 0.0, %v805
  %v807 = vpop.f32.mrf.mxu0
  %808 = vmatprep.mubr.bf16.mxu0 %v614
  %809 = vmatmul.mubr.bf16.gmra.mxu0 %v447
  %v810 = vpop.f32.mrf.mxu0
  %v811 = vadd.f32 0.0, %v810
  %v812 = vpop.f32.mrf.mxu0
  %v813 = vpop.f32.mrf.mxu0
  %v814 = vadd.f32 0.0, %v813
  %v815 = vpop.f32.mrf.mxu0
  %816 = vmatprep.mubr.bf16.mxu0 %v617
  %817 = vmatmul.mubr.bf16.gmra.mxu0 %v449
  %v818 = vpop.f32.mrf.mxu0
  %v819 = vadd.f32 0.0, %v818
  %v820 = vpop.f32.mrf.mxu0
  %v821 = vpop.f32.mrf.mxu0
  %v822 = vadd.f32 0.0, %v821
  %v823 = vpop.f32.mrf.mxu0
  %824 = vmatprep.mubr.bf16.mxu0 %v620
  %825 = vmatmul.mubr.bf16.gmra.mxu0 %v451
  %v826 = vpop.f32.mrf.mxu0
  %v827 = vadd.f32 0.0, %v826
  %v828 = vpop.f32.mrf.mxu0
  %v829 = vpop.f32.mrf.mxu0
  %v830 = vadd.f32 0.0, %v829
  %v831 = vpop.f32.mrf.mxu0
  %832 = vmatprep.mubr.bf16.mxu0 %v623
  %833 = vmatmul.mubr.bf16.gmra.mxu0 %v453
  %v834 = vpop.f32.mrf.mxu0
  %v835 = vadd.f32 0.0, %v834
  %v836 = vpop.f32.mrf.mxu0
  %v837 = vpop.f32.mrf.mxu0
  %v838 = vadd.f32 0.0, %v837
  %v839 = vpop.f32.mrf.mxu0
  %840 = vmatprep.mubr.bf16.mxu0 %v626
  %841 = vmatmul.mubr.bf16.gmra.mxu0 %v455
  %v842 = vpop.f32.mrf.mxu0
  %v843 = vadd.f32 0.0, %v842
  %v844 = vpop.f32.mrf.mxu0
  %v845 = vpop.f32.mrf.mxu0
  %v846 = vadd.f32 0.0, %v845
  %v847 = vpop.f32.mrf.mxu0
  %848 = vmatprep.mubr.bf16.mxu0 %v629
  %849 = vmatmul.mubr.bf16.gmra.mxu0 %v457
  %v850 = vpop.f32.mrf.mxu0
  %v851 = vadd.f32 0.0, %v850
  %v852 = vpop.f32.mrf.mxu0
  %v853 = vpop.f32.mrf.mxu0
  %v854 = vadd.f32 0.0, %v853
  %v855 = vpop.f32.mrf.mxu0
  %856 = vmatprep.mubr.bf16.mxu0 %v632
  %857 = vmatmul.mubr.bf16.gmra.mxu0 %v459
  %v858 = vpop.f32.mrf.mxu0
  %v859 = vadd.f32 0.0, %v858
  %v860 = vpop.f32.mrf.mxu0
  %v861 = vpop.f32.mrf.mxu0
  %v862 = vadd.f32 0.0, %v861
  %v863 = vpop.f32.mrf.mxu0
  %864 = vmatprep.mubr.bf16.mxu0 %v635
  %865 = vmatmul.mubr.bf16.gmra.mxu0 %v461
  %v866 = vpop.f32.mrf.mxu0
  %v867 = vadd.f32 0.0, %v866
  %v868 = vpop.f32.mrf.mxu0
  %v869 = vpop.f32.mrf.mxu0
  %v870 = vadd.f32 0.0, %v869
  %v871 = vpop.f32.mrf.mxu0
  %872 = vmatprep.mubr.bf16.mxu0 %v638
  %873 = vmatmul.mubr.bf16.gmra.mxu0 %v463
  %v874 = vpop.f32.mrf.mxu0
  %v875 = vadd.f32 0.0, %v874
  %v876 = vpop.f32.mrf.mxu0
  %v877 = vpop.f32.mrf.mxu0
  %v878 = vadd.f32 0.0, %v877
  %v879 = vpop.f32.mrf.mxu0
  %880 = vmatprep.mubr.bf16.mxu0 %v641
  %881 = vmatmul.mubr.bf16.gmra.mxu0 %v465
  %v882 = vpop.f32.mrf.mxu0
  %v883 = vadd.f32 0.0, %v882
  %v884 = vpop.f32.mrf.mxu0
  %v885 = vpop.f32.mrf.mxu0
  %v886 = vadd.f32 0.0, %v885
  %v887 = vpop.f32.mrf.mxu0
  %888 = vmatprep.mubr.bf16.mxu0 %v644
  %889 = vmatmul.mubr.bf16.gmra.mxu0 %v467
  %v890 = vpop.f32.mrf.mxu0
  %v891 = vadd.f32 0.0, %v890
  %v892 = vpop.f32.mrf.mxu0
  %v893 = vpop.f32.mrf.mxu0
  %v894 = vadd.f32 0.0, %v893
  %v895 = vpop.f32.mrf.mxu0
  %896 = vmatprep.mubr.bf16.mxu0 %v647
  %897 = vmatmul.mubr.bf16.gmra.mxu0 %v469
  %v898 = vpop.f32.mrf.mxu0
  %v899 = vadd.f32 0.0, %v898
  %v900 = vpop.f32.mrf.mxu0
  %v901 = vpop.f32.mrf.mxu0
  %v902 = vadd.f32 0.0, %v901
  %v903 = vpop.f32.mrf.mxu0
  %904 = vmatprep.mubr.bf16.mxu0 %v650
  %905 = vmatmul.mubr.bf16.gmra.mxu0 %v471
  %v906 = vpop.f32.mrf.mxu0
  %v907 = vadd.f32 0.0, %v906
  %v908 = vpop.f32.mrf.mxu0
  %v909 = vpop.f32.mrf.mxu0
  %v910 = vadd.f32 0.0, %v909
  %v911 = vpop.f32.mrf.mxu0
  %912 = vmatprep.mubr.bf16.mxu0 %v653
  %913 = vmatmul.mubr.bf16.gmra.mxu0 %v473
  %v914 = vpop.f32.mrf.mxu0
  %v915 = vadd.f32 0.0, %v914
  %v916 = vpop.f32.mrf.mxu0
  %v917 = vpop.f32.mrf.mxu0
  %v918 = vadd.f32 0.0, %v917
  %v919 = vpop.f32.mrf.mxu0
  %920 = vmatprep.mubr.bf16.mxu0 %v656
  %921 = vmatmul.mubr.bf16.gmra.mxu0 %v475
  %v922 = vpop.f32.mrf.mxu0
  %v923 = vadd.f32 0.0, %v922
  %v924 = vpop.f32.mrf.mxu0
  %v925 = vpop.f32.mrf.mxu0
  %v926 = vadd.f32 0.0, %v925
  %v927 = vpop.f32.mrf.mxu0
  %928 = vmatprep.mubr.bf16.mxu0 %v659
  %929 = vmatmul.mubr.bf16.gmra.mxu0 %v477
  %v930 = vpop.f32.mrf.mxu0
  %v931 = vadd.f32 0.0, %v930
  %v932 = vpop.f32.mrf.mxu0
  %v933 = vpop.f32.mrf.mxu0
  %v934 = vadd.f32 0.0, %v933
  %v935 = vpop.f32.mrf.mxu0
  %936 = vmatprep.mubr.bf16.mxu0 %v662
  %937 = vmatmul.mubr.bf16.gmra.mxu0 %v479
  %v938 = vpop.f32.mrf.mxu0
  %v939 = vadd.f32 0.0, %v938
  %v940 = vpop.f32.mrf.mxu0
  %v941 = vpop.f32.mrf.mxu0
  %v942 = vadd.f32 0.0, %v941
  %v943 = vpop.f32.mrf.mxu0
  %944 = vmatprep.mubr.bf16.mxu0 %v665
  %945 = vmatmul.mubr.bf16.gmra.mxu0 %v481
  %v946 = vpop.f32.mrf.mxu0
  %v947 = vadd.f32 0.0, %v946
  %v948 = vpop.f32.mrf.mxu0
  %v949 = vpop.f32.mrf.mxu0
  %v950 = vadd.f32 0.0, %v949
  %v951 = vpop.f32.mrf.mxu0
  %952 = vmatprep.mubr.bf16.mxu0 %v668
  %953 = vmatmul.mubr.bf16.gmra.mxu0 %v483
  %v954 = vpop.f32.mrf.mxu0
  %v955 = vadd.f32 0.0, %v954
  %v956 = vpop.f32.mrf.mxu0
  %v957 = vpop.f32.mrf.mxu0
  %v958 = vadd.f32 0.0, %v957
  %v959 = vpop.f32.mrf.mxu0
  %960 = vmatprep.mubr.bf16.mxu0 %v671
  %961 = vmatmul.mubr.bf16.gmra.mxu0 %v485
  %v962 = vpop.f32.mrf.mxu0
  %v963 = vadd.f32 0.0, %v962
  %v964 = vpop.f32.mrf.mxu0
  %v965 = vpop.f32.mrf.mxu0
  %v966 = vadd.f32 0.0, %v965
  %v967 = vpop.f32.mrf.mxu0
  %968 = vdwg.mxu0
  %v969 = vadd.f32 %v84, %v715
  %v970 = vadd.f32 %v85, %v718
  %v971 = vadd.f32 %v86, %v723
  %v972 = vadd.f32 %v87, %v726
  %v973 = vadd.f32 %v88, %v731
  %v974 = vadd.f32 %v89, %v734
  %v975 = vadd.f32 %v90, %v739
  %v976 = vadd.f32 %v91, %v742
  %v977 = vadd.f32 %v92, %v747
  %v978 = vadd.f32 %v93, %v750
  %v979 = vadd.f32 %v94, %v755
  %v980 = vadd.f32 %v95, %v758
  %v981 = vadd.f32 %v96, %v763
  %v982 = vadd.f32 %v97, %v766
  %v983 = vadd.f32 %v98, %v771
  %v984 = vadd.f32 %v99, %v774
  %v985 = vadd.f32 %v100, %v779
  %v986 = vadd.f32 %v101, %v782
  %v987 = vadd.f32 %v102, %v787
  %v988 = vadd.f32 %v103, %v790
  %v989 = vadd.f32 %v104, %v795
  %v990 = vadd.f32 %v105, %v798
  %v991 = vadd.f32 %v106, %v803
  %v992 = vadd.f32 %v107, %v806
  %v993 = vadd.f32 %v108, %v811
  %v994 = vadd.f32 %v109, %v814
  %v995 = vadd.f32 %v110, %v819
  %v996 = vadd.f32 %v111, %v822
  %v997 = vadd.f32 %v112, %v827
  %v998 = vadd.f32 %v113, %v830
  %v999 = vadd.f32 %v114, %v835
  %v1000 = vadd.f32 %v115, %v838
  %v1001 = vadd.f32 %v116, %v843
  %v1002 = vadd.f32 %v117, %v846
  %v1003 = vadd.f32 %v118, %v851
  %v1004 = vadd.f32 %v119, %v854
  %v1005 = vadd.f32 %v120, %v859
  %v1006 = vadd.f32 %v121, %v862
  %v1007 = vadd.f32 %v122, %v867
  %v1008 = vadd.f32 %v123, %v870
  %v1009 = vadd.f32 %v124, %v875
  %v1010 = vadd.f32 %v125, %v878
  %v1011 = vadd.f32 %v126, %v883
  %v1012 = vadd.f32 %v127, %v886
  %v1013 = vadd.f32 %v128, %v891
  %v1014 = vadd.f32 %v129, %v894
  %v1015 = vadd.f32 %v130, %v899
  %v1016 = vadd.f32 %v131, %v902
  %v1017 = vadd.f32 %v132, %v907
  %v1018 = vadd.f32 %v133, %v910
  %v1019 = vadd.f32 %v134, %v915
  %v1020 = vadd.f32 %v135, %v918
  %v1021 = vadd.f32 %v136, %v923
  %v1022 = vadd.f32 %v137, %v926
  %v1023 = vadd.f32 %v138, %v931
  %v1024 = vadd.f32 %v139, %v934
  %v1025 = vadd.f32 %v140, %v939
  %v1026 = vadd.f32 %v141, %v942
  %v1027 = vadd.f32 %v142, %v947
  %v1028 = vadd.f32 %v143, %v950
  %v1029 = vadd.f32 %v144, %v955
  %v1030 = vadd.f32 %v145, %v958
  %v1031 = vadd.f32 %v146, %v963
  %v1032 = vadd.f32 %v147, %v966
  %vm1033 = vcmask 523264
  %1034 = vst.msk [vmem:[#allocation2] sm:$0xff] %vm1033, %v969
  %1035 = vst.msk [vmem:[#allocation2 + $0x8] sm:$0xff] %vm1033, %v970
  %1036 = vst.msk [vmem:[#allocation2 + $0x10] sm:$0xff] %vm1033, %v971
  %1037 = vst.msk [vmem:[#allocation2 + $0x18] sm:$0xff] %vm1033, %v972
  %1038 = vst.msk [vmem:[#allocation2 + $0x20] sm:$0xff] %vm1033, %v973
  %1039 = vst.msk [vmem:[#allocation2 + $0x28] sm:$0xff] %vm1033, %v974
  %1040 = vst.msk [vmem:[#allocation2 + $0x30] sm:$0xff] %vm1033, %v975
  %1041 = vst.msk [vmem:[#allocation2 + $0x38] sm:$0xff] %vm1033, %v976
  %1042 = vst.msk [vmem:[#allocation2 + $0x40] sm:$0xff] %vm1033, %v977
  %1043 = vst.msk [vmem:[#allocation2 + $0x48] sm:$0xff] %vm1033, %v978
  %1044 = vst.msk [vmem:[#allocation2 + $0x50] sm:$0xff] %vm1033, %v979
  %1045 = vst.msk [vmem:[#allocation2 + $0x58] sm:$0xff] %vm1033, %v980
  %1046 = vst.msk [vmem:[#allocation2 + $0x60] sm:$0xff] %vm1033, %v981
  %1047 = vst.msk [vmem:[#allocation2 + $0x68] sm:$0xff] %vm1033, %v982
  %1048 = vst.msk [vmem:[#allocation2 + $0x70] sm:$0xff] %vm1033, %v983
  %1049 = vst.msk [vmem:[#allocation2 + $0x78] sm:$0xff] %vm1033, %v984
  %1050 = vst.msk [vmem:[#allocation2 + $0x80] sm:$0xff] %vm1033, %v985
  %1051 = vst.msk [vmem:[#allocation2 + $0x88] sm:$0xff] %vm1033, %v986
  %1052 = vst.msk [vmem:[#allocation2 + $0x90] sm:$0xff] %vm1033, %v987
  %1053 = vst.msk [vmem:[#allocation2 + $0x98] sm:$0xff] %vm1033, %v988
  %1054 = vst.msk [vmem:[#allocation2 + $0xa0] sm:$0xff] %vm1033, %v989
  %1055 = vst.msk [vmem:[#allocation2 + $0xa8] sm:$0xff] %vm1033, %v990
  %1056 = vst.msk [vmem:[#allocation2 + $0xb0] sm:$0xff] %vm1033, %v991
  %1057 = vst.msk [vmem:[#allocation2 + $0xb8] sm:$0xff] %vm1033, %v992
  %1058 = vst.msk [vmem:[#allocation2 + $0xc0] sm:$0xff] %vm1033, %v993
  %1059 = vst.msk [vmem:[#allocation2 + $0xc8] sm:$0xff] %vm1033, %v994
  %1060 = vst.msk [vmem:[#allocation2 + $0xd0] sm:$0xff] %vm1033, %v995
  %1061 = vst.msk [vmem:[#allocation2 + $0xd8] sm:$0xff] %vm1033, %v996
  %1062 = vst.msk [vmem:[#allocation2 + $0xe0] sm:$0xff] %vm1033, %v997
  %1063 = vst.msk [vmem:[#allocation2 + $0xe8] sm:$0xff] %vm1033, %v998
  %1064 = vst.msk [vmem:[#allocation2 + $0xf0] sm:$0xff] %vm1033, %v999
  %1065 = vst.msk [vmem:[#allocation2 + $0xf8] sm:$0xff] %vm1033, %v1000
  %1066 = vst.msk [vmem:[#allocation2 + $0x100] sm:$0xff] %vm1033, %v1001
  %1067 = vst.msk [vmem:[#allocation2 + $0x108] sm:$0xff] %vm1033, %v1002
  %1068 = vst.msk [vmem:[#allocation2 + $0x110] sm:$0xff] %vm1033, %v1003
  %1069 = vst.msk [vmem:[#allocation2 + $0x118] sm:$0xff] %vm1033, %v1004
  %1070 = vst.msk [vmem:[#allocation2 + $0x120] sm:$0xff] %vm1033, %v1005
  %1071 = vst.msk [vmem:[#allocation2 + $0x128] sm:$0xff] %vm1033, %v1006
  %1072 = vst.msk [vmem:[#allocation2 + $0x130] sm:$0xff] %vm1033, %v1007
  %1073 = vst.msk [vmem:[#allocation2 + $0x138] sm:$0xff] %vm1033, %v1008
  %1074 = vst.msk [vmem:[#allocation2 + $0x140] sm:$0xff] %vm1033, %v1009
  %1075 = vst.msk [vmem:[#allocation2 + $0x148] sm:$0xff] %vm1033, %v1010
  %1076 = vst.msk [vmem:[#allocation2 + $0x150] sm:$0xff] %vm1033, %v1011
  %1077 = vst.msk [vmem:[#allocation2 + $0x158] sm:$0xff] %vm1033, %v1012
  %1078 = vst.msk [vmem:[#allocation2 + $0x160] sm:$0xff] %vm1033, %v1013
  %1079 = vst.msk [vmem:[#allocation2 + $0x168] sm:$0xff] %vm1033, %v1014
  %1080 = vst.msk [vmem:[#allocation2 + $0x170] sm:$0xff] %vm1033, %v1015
  %1081 = vst.msk [vmem:[#allocation2 + $0x178] sm:$0xff] %vm1033, %v1016
  %1082 = vst.msk [vmem:[#allocation2 + $0x180] sm:$0xff] %vm1033, %v1017
  %1083 = vst.msk [vmem:[#allocation2 + $0x188] sm:$0xff] %vm1033, %v1018
  %1084 = vst.msk [vmem:[#allocation2 + $0x190] sm:$0xff] %vm1033, %v1019
  %1085 = vst.msk [vmem:[#allocation2 + $0x198] sm:$0xff] %vm1033, %v1020
  %1086 = vst.msk [vmem:[#allocation2 + $0x1a0] sm:$0xff] %vm1033, %v1021
  %1087 = vst.msk [vmem:[#allocation2 + $0x1a8] sm:$0xff] %vm1033, %v1022
  %1088 = vst.msk [vmem:[#allocation2 + $0x1b0] sm:$0xff] %vm1033, %v1023
  %1089 = vst.msk [vmem:[#allocation2 + $0x1b8] sm:$0xff] %vm1033, %v1024
  %1090 = vst.msk [vmem:[#allocation2 + $0x1c0] sm:$0xff] %vm1033, %v1025
  %1091 = vst.msk [vmem:[#allocation2 + $0x1c8] sm:$0xff] %vm1033, %v1026
  %1092 = vst.msk [vmem:[#allocation2 + $0x1d0] sm:$0xff] %vm1033, %v1027
  %1093 = vst.msk [vmem:[#allocation2 + $0x1d8] sm:$0xff] %vm1033, %v1028
  %1094 = vst.msk [vmem:[#allocation2 + $0x1e0] sm:$0xff] %vm1033, %v1029
  %1095 = vst.msk [vmem:[#allocation2 + $0x1e8] sm:$0xff] %vm1033, %v1030
  %1096 = vst.msk [vmem:[#allocation2 + $0x1f0] sm:$0xff] %vm1033, %v1031
  %1097 = vst.msk [vmem:[#allocation2 + $0x1f8] sm:$0xff] %vm1033, %v1032
  // Predicated region
  $region18: #{tpu_custom_call.1} parent=0 // pred_check
    %p1098 = pneg %p15
  $region19: #{tpu_custom_call.1} parent=0 // pred_check_branch
    %1100 = sbr.rel (%p1098) target = $region21
  $region20: #{tpu_custom_call.1} parent=0 // pred_region
    %v1101 = vld [vmem:[#allocation2] sm:$0xff]
    %v1102 = vld [vmem:[#allocation2 + $0x8] sm:$0xff]
    %v1103 = vld [vmem:[#allocation2 + $0x10] sm:$0xff]
    %v1104 = vld [vmem:[#allocation2 + $0x18] sm:$0xff]
    %v1105 = vld [vmem:[#allocation2 + $0x20] sm:$0xff]
    %v1106 = vld [vmem:[#allocation2 + $0x28] sm:$0xff]
    %v1107 = vld [vmem:[#allocation2 + $0x30] sm:$0xff]
    %v1108 = vld [vmem:[#allocation2 + $0x38] sm:$0xff]
    %v1109 = vld [vmem:[#allocation2 + $0x40] sm:$0xff]
    %v1110 = vld [vmem:[#allocation2 + $0x48] sm:$0xff]
    %v1111 = vld [vmem:[#allocation2 + $0x50] sm:$0xff]
    %v1112 = vld [vmem:[#allocation2 + $0x58] sm:$0xff]
    %v1113 = vld [vmem:[#allocation2 + $0x60] sm:$0xff]
    %v1114 = vld [vmem:[#allocation2 + $0x68] sm:$0xff]
    %v1115 = vld [vmem:[#allocation2 + $0x70] sm:$0xff]
    %v1116 = vld [vmem:[#allocation2 + $0x78] sm:$0xff]
    %v1117 = vld [vmem:[#allocation2 + $0x80] sm:$0xff]
    %v1118 = vld [vmem:[#allocation2 + $0x88] sm:$0xff]
    %v1119 = vld [vmem:[#allocation2 + $0x90] sm:$0xff]
    %v1120 = vld [vmem:[#allocation2 + $0x98] sm:$0xff]
    %v1121 = vld [vmem:[#allocation2 + $0xa0] sm:$0xff]
    %v1122 = vld [vmem:[#allocation2 + $0xa8] sm:$0xff]
    %v1123 = vld [vmem:[#allocation2 + $0xb0] sm:$0xff]
    %v1124 = vld [vmem:[#allocation2 + $0xb8] sm:$0xff]
    %v1125 = vld [vmem:[#allocation2 + $0xc0] sm:$0xff]
    %v1126 = vld [vmem:[#allocation2 + $0xc8] sm:$0xff]
    %v1127 = vld [vmem:[#allocation2 + $0xd0] sm:$0xff]
    %v1128 = vld [vmem:[#allocation2 + $0xd8] sm:$0xff]
    %v1129 = vld [vmem:[#allocation2 + $0xe0] sm:$0xff]
    %v1130 = vld [vmem:[#allocation2 + $0xe8] sm:$0xff]
    %v1131 = vld [vmem:[#allocation2 + $0xf0] sm:$0xff]
    %v1132 = vld [vmem:[#allocation2 + $0xf8] sm:$0xff]
    %v1133 = vld [vmem:[#allocation2 + $0x100] sm:$0xff]
    %v1134 = vld [vmem:[#allocation2 + $0x108] sm:$0xff]
    %v1135 = vld [vmem:[#allocation2 + $0x110] sm:$0xff]
    %v1136 = vld [vmem:[#allocation2 + $0x118] sm:$0xff]
    %v1137 = vld [vmem:[#allocation2 + $0x120] sm:$0xff]
    %v1138 = vld [vmem:[#allocation2 + $0x128] sm:$0xff]
    %v1139 = vld [vmem:[#allocation2 + $0x130] sm:$0xff]
    %v1140 = vld [vmem:[#allocation2 + $0x138] sm:$0xff]
    %v1141 = vld [vmem:[#allocation2 + $0x140] sm:$0xff]
    %v1142 = vld [vmem:[#allocation2 + $0x148] sm:$0xff]
    %v1143 = vld [vmem:[#allocation2 + $0x150] sm:$0xff]
    %v1144 = vld [vmem:[#allocation2 + $0x158] sm:$0xff]
    %v1145 = vld [vmem:[#allocation2 + $0x160] sm:$0xff]
    %v1146 = vld [vmem:[#allocation2 + $0x168] sm:$0xff]
    %v1147 = vld [vmem:[#allocation2 + $0x170] sm:$0xff]
    %v1148 = vld [vmem:[#allocation2 + $0x178] sm:$0xff]
    %v1149 = vld [vmem:[#allocation2 + $0x180] sm:$0xff]
    %v1150 = vld [vmem:[#allocation2 + $0x188] sm:$0xff]
    %v1151 = vld [vmem:[#allocation2 + $0x190] sm:$0xff]
    %v1152 = vld [vmem:[#allocation2 + $0x198] sm:$0xff]
    %v1153 = vld [vmem:[#allocation2 + $0x1a0] sm:$0xff]
    %v1154 = vld [vmem:[#allocation2 + $0x1a8] sm:$0xff]
    %v1155 = vld [vmem:[#allocation2 + $0x1b0] sm:$0xff]
    %v1156 = vld [vmem:[#allocation2 + $0x1b8] sm:$0xff]
    %v1157 = vld [vmem:[#allocation2 + $0x1c0] sm:$0xff]
    %v1158 = vld [vmem:[#allocation2 + $0x1c8] sm:$0xff]
    %v1159 = vld [vmem:[#allocation2 + $0x1d0] sm:$0xff]
    %v1160 = vld [vmem:[#allocation2 + $0x1d8] sm:$0xff]
    %v1161 = vld [vmem:[#allocation2 + $0x1e0] sm:$0xff]
    %v1162 = vld [vmem:[#allocation2 + $0x1e8] sm:$0xff]
    %v1163 = vld [vmem:[#allocation2 + $0x1f0] sm:$0xff]
    %v1164 = vld [vmem:[#allocation2 + $0x1f8] sm:$0xff]
    %v1165 = vld [vmem:[%s2] sm:$0x1]
    %v1167 = vlaneseq
    %v1168 = vshrl.u32 %v1167, 7
    %v1169 = vsub.s32 0, %v1168
    %v1170 = vrot.slane %v1165, %v1169
    %v1172 = vadd.f32 %v1101, %v1170
    %v1173 = vadd.f32 %v1102, %v1170
    %v1174 = vadd.f32 %v1103, %v1170
    %v1175 = vadd.f32 %v1104, %v1170
    %v1176 = vadd.f32 %v1105, %v1170
    %v1177 = vadd.f32 %v1106, %v1170
    %v1178 = vadd.f32 %v1107, %v1170
    %v1179 = vadd.f32 %v1108, %v1170
    %v1180 = vadd.f32 %v1109, %v1170
    %v1181 = vadd.f32 %v1110, %v1170
    %v1182 = vadd.f32 %v1111, %v1170
    %v1183 = vadd.f32 %v1112, %v1170
    %v1184 = vadd.f32 %v1113, %v1170
    %v1185 = vadd.f32 %v1114, %v1170
    %v1186 = vadd.f32 %v1115, %v1170
    %v1187 = vadd.f32 %v1116, %v1170
    %v1188 = vadd.f32 %v1117, %v1170
    %v1189 = vadd.f32 %v1118, %v1170
    %v1190 = vadd.f32 %v1119, %v1170
    %v1191 = vadd.f32 %v1120, %v1170
    %v1192 = vadd.f32 %v1121, %v1170
    %v1193 = vadd.f32 %v1122, %v1170
    %v1194 = vadd.f32 %v1123, %v1170
    %v1195 = vadd.f32 %v1124, %v1170
    %v1196 = vadd.f32 %v1125, %v1170
    %v1197 = vadd.f32 %v1126, %v1170
    %v1198 = vadd.f32 %v1127, %v1170
    %v1199 = vadd.f32 %v1128, %v1170
    %v1200 = vadd.f32 %v1129, %v1170
    %v1201 = vadd.f32 %v1130, %v1170
    %v1202 = vadd.f32 %v1131, %v1170
    %v1203 = vadd.f32 %v1132, %v1170
    %v1204 = vadd.f32 %v1133, %v1170
    %v1205 = vadd.f32 %v1134, %v1170
    %v1206 = vadd.f32 %v1135, %v1170
    %v1207 = vadd.f32 %v1136, %v1170
    %v1208 = vadd.f32 %v1137, %v1170
    %v1209 = vadd.f32 %v1138, %v1170
    %v1210 = vadd.f32 %v1139, %v1170
    %v1211 = vadd.f32 %v1140, %v1170
    %v1212 = vadd.f32 %v1141, %v1170
    %v1213 = vadd.f32 %v1142, %v1170
    %v1214 = vadd.f32 %v1143, %v1170
    %v1215 = vadd.f32 %v1144, %v1170
    %v1216 = vadd.f32 %v1145, %v1170
    %v1217 = vadd.f32 %v1146, %v1170
    %v1218 = vadd.f32 %v1147, %v1170
    %v1219 = vadd.f32 %v1148, %v1170
    %v1220 = vadd.f32 %v1149, %v1170
    %v1221 = vadd.f32 %v1150, %v1170
    %v1222 = vadd.f32 %v1151, %v1170
    %v1223 = vadd.f32 %v1152, %v1170
    %v1224 = vadd.f32 %v1153, %v1170
    %v1225 = vadd.f32 %v1154, %v1170
    %v1226 = vadd.f32 %v1155, %v1170
    %v1227 = vadd.f32 %v1156, %v1170
    %v1228 = vadd.f32 %v1157, %v1170
    %v1229 = vadd.f32 %v1158, %v1170
    %v1230 = vadd.f32 %v1159, %v1170
    %v1231 = vadd.f32 %v1160, %v1170
    %v1232 = vadd.f32 %v1161, %v1170
    %v1233 = vadd.f32 %v1162, %v1170
    %v1234 = vadd.f32 %v1163, %v1170
    %v1235 = vadd.f32 %v1164, %v1170
    %v1236 = vpack.c.bf16 %v1173, %v1172
    %v1237 = vpack.c.bf16 %v1175, %v1174
    %v1238 = vpack.c.bf16 %v1177, %v1176
    %v1239 = vpack.c.bf16 %v1179, %v1178
    %v1240 = vpack.c.bf16 %v1181, %v1180
    %v1241 = vpack.c.bf16 %v1183, %v1182
    %v1242 = vpack.c.bf16 %v1185, %v1184
    %v1243 = vpack.c.bf16 %v1187, %v1186
    %v1244 = vpack.c.bf16 %v1189, %v1188
    %v1245 = vpack.c.bf16 %v1191, %v1190
    %v1246 = vpack.c.bf16 %v1193, %v1192
    %v1247 = vpack.c.bf16 %v1195, %v1194
    %v1248 = vpack.c.bf16 %v1197, %v1196
    %v1249 = vpack.c.bf16 %v1199, %v1198
    %v1250 = vpack.c.bf16 %v1201, %v1200
    %v1251 = vpack.c.bf16 %v1203, %v1202
    %v1252 = vpack.c.bf16 %v1205, %v1204
    %v1253 = vpack.c.bf16 %v1207, %v1206
    %v1254 = vpack.c.bf16 %v1209, %v1208
    %v1255 = vpack.c.bf16 %v1211, %v1210
    %v1256 = vpack.c.bf16 %v1213, %v1212
    %v1257 = vpack.c.bf16 %v1215, %v1214
    %v1258 = vpack.c.bf16 %v1217, %v1216
    %v1259 = vpack.c.bf16 %v1219, %v1218
    %v1260 = vpack.c.bf16 %v1221, %v1220
    %v1261 = vpack.c.bf16 %v1223, %v1222
    %v1262 = vpack.c.bf16 %v1225, %v1224
    %v1263 = vpack.c.bf16 %v1227, %v1226
    %v1264 = vpack.c.bf16 %v1229, %v1228
    %v1265 = vpack.c.bf16 %v1231, %v1230
    %v1266 = vpack.c.bf16 %v1233, %v1232
    %v1267 = vpack.c.bf16 %v1235, %v1234
    %v1300 = vunpack.c.l.b16 %v1236
    %v1301 = vunpack.c.h.b16 %v1236
    %v1302 = vunpack.c.l.b16 %v1237
    %v1303 = vunpack.c.h.b16 %v1237
    %v1304 = vunpack.c.l.b16 %v1238
    %v1305 = vunpack.c.h.b16 %v1238
    %v1306 = vunpack.c.l.b16 %v1239
    %v1307 = vunpack.c.h.b16 %v1239
    %v1308 = vunpack.c.l.b16 %v1240
    %v1309 = vunpack.c.h.b16 %v1240
    %v1310 = vunpack.c.l.b16 %v1241
    %v1311 = vunpack.c.h.b16 %v1241
    %v1312 = vunpack.c.l.b16 %v1242
    %v1313 = vunpack.c.h.b16 %v1242
    %v1314 = vunpack.c.l.b16 %v1243
    %v1315 = vunpack.c.h.b16 %v1243
    %v1316 = vunpack.c.l.b16 %v1244
    %v1317 = vunpack.c.h.b16 %v1244
    %v1318 = vunpack.c.l.b16 %v1245
    %v1319 = vunpack.c.h.b16 %v1245
    %v1320 = vunpack.c.l.b16 %v1246
    %v1321 = vunpack.c.h.b16 %v1246
    %v1322 = vunpack.c.l.b16 %v1247
    %v1323 = vunpack.c.h.b16 %v1247
    %v1324 = vunpack.c.l.b16 %v1248
    %v1325 = vunpack.c.h.b16 %v1248
    %v1326 = vunpack.c.l.b16 %v1249
    %v1327 = vunpack.c.h.b16 %v1249
    %v1328 = vunpack.c.l.b16 %v1250
    %v1329 = vunpack.c.h.b16 %v1250
    %v1330 = vunpack.c.l.b16 %v1251
    %v1331 = vunpack.c.h.b16 %v1251
    %v1332 = vunpack.c.l.b16 %v1252
    %v1333 = vunpack.c.h.b16 %v1252
    %v1334 = vunpack.c.l.b16 %v1253
    %v1335 = vunpack.c.h.b16 %v1253
    %v1336 = vunpack.c.l.b16 %v1254
    %v1337 = vunpack.c.h.b16 %v1254
    %v1338 = vunpack.c.l.b16 %v1255
    %v1339 = vunpack.c.h.b16 %v1255
    %v1340 = vunpack.c.l.b16 %v1256
    %v1341 = vunpack.c.h.b16 %v1256
    %v1342 = vunpack.c.l.b16 %v1257
    %v1343 = vunpack.c.h.b16 %v1257
    %v1344 = vunpack.c.l.b16 %v1258
    %v1345 = vunpack.c.h.b16 %v1258
    %v1346 = vunpack.c.l.b16 %v1259
    %v1347 = vunpack.c.h.b16 %v1259
    %v1348 = vunpack.c.l.b16 %v1260
    %v1349 = vunpack.c.h.b16 %v1260
    %v1350 = vunpack.c.l.b16 %v1261
    %v1351 = vunpack.c.h.b16 %v1261
    %v1352 = vunpack.c.l.b16 %v1262
    %v1353 = vunpack.c.h.b16 %v1262
    %v1354 = vunpack.c.l.b16 %v1263
    %v1355 = vunpack.c.h.b16 %v1263
    %v1356 = vunpack.c.l.b16 %v1264
    %v1357 = vunpack.c.h.b16 %v1264
    %v1358 = vunpack.c.l.b16 %v1265
    %v1359 = vunpack.c.h.b16 %v1265
    %v1360 = vunpack.c.l.b16 %v1266
    %v1361 = vunpack.c.h.b16 %v1266
    %v1362 = vunpack.c.l.b16 %v1267
    %v1363 = vunpack.c.h.b16 %v1267
    %v1364 = vpack.c.b16 %v1300, %v1300
    %v1365 = vpack.c.b16 %v1301, %v1301
    %v1366 = vpack.c.b16 %v1302, %v1302
    %v1367 = vpack.c.b16 %v1303, %v1303
    %v1368 = vpack.c.b16 %v1304, %v1304
    %v1369 = vpack.c.b16 %v1305, %v1305
    %v1370 = vpack.c.b16 %v1306, %v1306
    %v1371 = vpack.c.b16 %v1307, %v1307
    %v1372 = vpack.c.b16 %v1308, %v1308
    %v1373 = vpack.c.b16 %v1309, %v1309
    %v1374 = vpack.c.b16 %v1310, %v1310
    %v1375 = vpack.c.b16 %v1311, %v1311
    %v1376 = vpack.c.b16 %v1312, %v1312
    %v1377 = vpack.c.b16 %v1313, %v1313
    %v1378 = vpack.c.b16 %v1314, %v1314
    %v1379 = vpack.c.b16 %v1315, %v1315
    %v1380 = vpack.c.b16 %v1316, %v1316
    %v1381 = vpack.c.b16 %v1317, %v1317
    %v1382 = vpack.c.b16 %v1318, %v1318
    %v1383 = vpack.c.b16 %v1319, %v1319
    %v1384 = vpack.c.b16 %v1320, %v1320
    %v1385 = vpack.c.b16 %v1321, %v1321
    %v1386 = vpack.c.b16 %v1322, %v1322
    %v1387 = vpack.c.b16 %v1323, %v1323
    %v1388 = vpack.c.b16 %v1324, %v1324
    %v1389 = vpack.c.b16 %v1325, %v1325
    %v1390 = vpack.c.b16 %v1326, %v1326
    %v1391 = vpack.c.b16 %v1327, %v1327
    %v1392 = vpack.c.b16 %v1328, %v1328
    %v1393 = vpack.c.b16 %v1329, %v1329
    %v1394 = vpack.c.b16 %v1330, %v1330
    %v1395 = vpack.c.b16 %v1331, %v1331
    %v1396 = vpack.c.b16 %v1332, %v1332
    %v1397 = vpack.c.b16 %v1333, %v1333
    %v1398 = vpack.c.b16 %v1334, %v1334
    %v1399 = vpack.c.b16 %v1335, %v1335
    %v1400 = vpack.c.b16 %v1336, %v1336
    %v1401 = vpack.c.b16 %v1337, %v1337
    %v1402 = vpack.c.b16 %v1338, %v1338
    %v1403 = vpack.c.b16 %v1339, %v1339
    %v1404 = vpack.c.b16 %v1340, %v1340
    %v1405 = vpack.c.b16 %v1341, %v1341
    %v1406 = vpack.c.b16 %v1342, %v1342
    %v1407 = vpack.c.b16 %v1343, %v1343
    %v1408 = vpack.c.b16 %v1344, %v1344
    %v1409 = vpack.c.b16 %v1345, %v1345
    %v1410 = vpack.c.b16 %v1346, %v1346
    %v1411 = vpack.c.b16 %v1347, %v1347
    %v1412 = vpack.c.b16 %v1348, %v1348
    %v1413 = vpack.c.b16 %v1349, %v1349
    %v1414 = vpack.c.b16 %v1350, %v1350
    %v1415 = vpack.c.b16 %v1351, %v1351
    %v1416 = vpack.c.b16 %v1352, %v1352
    %v1417 = vpack.c.b16 %v1353, %v1353
    %v1418 = vpack.c.b16 %v1354, %v1354
    %v1419 = vpack.c.b16 %v1355, %v1355
    %v1420 = vpack.c.b16 %v1356, %v1356
    %v1421 = vpack.c.b16 %v1357, %v1357
    %v1422 = vpack.c.b16 %v1358, %v1358
    %v1423 = vpack.c.b16 %v1359, %v1359
    %v1424 = vpack.c.b16 %v1360, %v1360
    %v1425 = vpack.c.b16 %v1361, %v1361
    %v1426 = vpack.c.b16 %v1362, %v1362
    %v1427 = vpack.c.b16 %v1363, %v1363
    %vm1492 = vcmask 519168
    %1493 = vst.msk [vmem:[%s3] sm:$0xf] %vm1492, %v1364
    %1494 = vst.msk [vmem:[%s3 + $0x4] sm:$0xf] %vm1492, %v1365
    %1495 = vst.msk [vmem:[%s3 + $0x8] sm:$0xf] %vm1492, %v1366
    %1496 = vst.msk [vmem:[%s3 + $0xc] sm:$0xf] %vm1492, %v1367
    %1497 = vst.msk [vmem:[%s3 + $0x10] sm:$0xf] %vm1492, %v1368
    %1498 = vst.msk [vmem:[%s3 + $0x14] sm:$0xf] %vm1492, %v1369
    %1499 = vst.msk [vmem:[%s3 + $0x18] sm:$0xf] %vm1492, %v1370
    %1500 = vst.msk [vmem:[%s3 + $0x1c] sm:$0xf] %vm1492, %v1371
    %1501 = vst.msk [vmem:[%s3 + $0x20] sm:$0xf] %vm1492, %v1372
    %1502 = vst.msk [vmem:[%s3 + $0x24] sm:$0xf] %vm1492, %v1373
    %1503 = vst.msk [vmem:[%s3 + $0x28] sm:$0xf] %vm1492, %v1374
    %1504 = vst.msk [vmem:[%s3 + $0x2c] sm:$0xf] %vm1492, %v1375
    %1505 = vst.msk [vmem:[%s3 + $0x30] sm:$0xf] %vm1492, %v1376
    %1506 = vst.msk [vmem:[%s3 + $0x34] sm:$0xf] %vm1492, %v1377
    %1507 = vst.msk [vmem:[%s3 + $0x38] sm:$0xf] %vm1492, %v1378
    %1508 = vst.msk [vmem:[%s3 + $0x3c] sm:$0xf] %vm1492, %v1379
    %1509 = vst.msk [vmem:[%s3 + $0x40] sm:$0xf] %vm1492, %v1380
    %1510 = vst.msk [vmem:[%s3 + $0x44] sm:$0xf] %vm1492, %v1381
    %1511 = vst.msk [vmem:[%s3 + $0x48] sm:$0xf] %vm1492, %v1382
    %1512 = vst.msk [vmem:[%s3 + $0x4c] sm:$0xf] %vm1492, %v1383
    %1513 = vst.msk [vmem:[%s3 + $0x50] sm:$0xf] %vm1492, %v1384
    %1514 = vst.msk [vmem:[%s3 + $0x54] sm:$0xf] %vm1492, %v1385
    %1515 = vst.msk [vmem:[%s3 + $0x58] sm:$0xf] %vm1492, %v1386
    %1516 = vst.msk [vmem:[%s3 + $0x5c] sm:$0xf] %vm1492, %v1387
    %1517 = vst.msk [vmem:[%s3 + $0x60] sm:$0xf] %vm1492, %v1388
    %1518 = vst.msk [vmem:[%s3 + $0x64] sm:$0xf] %vm1492, %v1389
    %1519 = vst.msk [vmem:[%s3 + $0x68] sm:$0xf] %vm1492, %v1390
    %1520 = vst.msk [vmem:[%s3 + $0x6c] sm:$0xf] %vm1492, %v1391
    %1521 = vst.msk [vmem:[%s3 + $0x70] sm:$0xf] %vm1492, %v1392
    %1522 = vst.msk [vmem:[%s3 + $0x74] sm:$0xf] %vm1492, %v1393
    %1523 = vst.msk [vmem:[%s3 + $0x78] sm:$0xf] %vm1492, %v1394
    %1524 = vst.msk [vmem:[%s3 + $0x7c] sm:$0xf] %vm1492, %v1395
    %1525 = vst.msk [vmem:[%s3 + $0x80] sm:$0xf] %vm1492, %v1396
    %1526 = vst.msk [vmem:[%s3 + $0x84] sm:$0xf] %vm1492, %v1397
    %1527 = vst.msk [vmem:[%s3 + $0x88] sm:$0xf] %vm1492, %v1398
    %1528 = vst.msk [vmem:[%s3 + $0x8c] sm:$0xf] %vm1492, %v1399
    %1529 = vst.msk [vmem:[%s3 + $0x90] sm:$0xf] %vm1492, %v1400
    %1530 = vst.msk [vmem:[%s3 + $0x94] sm:$0xf] %vm1492, %v1401
    %1531 = vst.msk [vmem:[%s3 + $0x98] sm:$0xf] %vm1492, %v1402
    %1532 = vst.msk [vmem:[%s3 + $0x9c] sm:$0xf] %vm1492, %v1403
    %1533 = vst.msk [vmem:[%s3 + $0xa0] sm:$0xf] %vm1492, %v1404
    %1534 = vst.msk [vmem:[%s3 + $0xa4] sm:$0xf] %vm1492, %v1405
    %1535 = vst.msk [vmem:[%s3 + $0xa8] sm:$0xf] %vm1492, %v1406
    %1536 = vst.msk [vmem:[%s3 + $0xac] sm:$0xf] %vm1492, %v1407
    %1537 = vst.msk [vmem:[%s3 + $0xb0] sm:$0xf] %vm1492, %v1408
    %1538 = vst.msk [vmem:[%s3 + $0xb4] sm:$0xf] %vm1492, %v1409
    %1539 = vst.msk [vmem:[%s3 + $0xb8] sm:$0xf] %vm1492, %v1410
    %1540 = vst.msk [vmem:[%s3 + $0xbc] sm:$0xf] %vm1492, %v1411
    %1541 = vst.msk [vmem:[%s3 + $0xc0] sm:$0xf] %vm1492, %v1412
    %1542 = vst.msk [vmem:[%s3 + $0xc4] sm:$0xf] %vm1492, %v1413
    %1543 = vst.msk [vmem:[%s3 + $0xc8] sm:$0xf] %vm1492, %v1414
    %1544 = vst.msk [vmem:[%s3 + $0xcc] sm:$0xf] %vm1492, %v1415
    %1545 = vst.msk [vmem:[%s3 + $0xd0] sm:$0xf] %vm1492, %v1416
    %1546 = vst.msk [vmem:[%s3 + $0xd4] sm:$0xf] %vm1492, %v1417
    %1547 = vst.msk [vmem:[%s3 + $0xd8] sm:$0xf] %vm1492, %v1418
    %1548 = vst.msk [vmem:[%s3 + $0xdc] sm:$0xf] %vm1492, %v1419
    %1549 = vst.msk [vmem:[%s3 + $0xe0] sm:$0xf] %vm1492, %v1420
    %1550 = vst.msk [vmem:[%s3 + $0xe4] sm:$0xf] %vm1492, %v1421
    %1551 = vst.msk [vmem:[%s3 + $0xe8] sm:$0xf] %vm1492, %v1422
    %1552 = vst.msk [vmem:[%s3 + $0xec] sm:$0xf] %vm1492, %v1423
    %1553 = vst.msk [vmem:[%s3 + $0xf0] sm:$0xf] %vm1492, %v1424
    %1554 = vst.msk [vmem:[%s3 + $0xf4] sm:$0xf] %vm1492, %v1425
    %1555 = vst.msk [vmem:[%s3 + $0xf8] sm:$0xf] %vm1492, %v1426
    %1556 = vst.msk [vmem:[%s3 + $0xfc] sm:$0xf] %vm1492, %v1427
  $region21: #{tpu_custom_call.1} parent=0 // pred_fallthru
    _
  // Predicated region
  $region22: #{tpu_custom_call.1} parent=0 // pred_check
    _
  $region23: #{tpu_custom_call.1} parent=0 // pred_check_branch
    %1558 = sbr.rel (0) target = $region25
  $region24: #{tpu_custom_call.1} parent=0 // pred_region
    _
  $region25: #{tpu_custom_call.1} parent=0 // pred_fallthru
    _
  // Predicated region
  $region26: #{tpu_custom_call.1} parent=0 // pred_check
    _
  $region27: #{tpu_custom_call.1} parent=0 // pred_check_branch
    %1560 = sbr.rel (0) target = $region29
  $region28: #{tpu_custom_call.1} parent=0 // pred_region
    _
  $region29: #{tpu_custom_call.1} parent=0 // pred_fallthru
    _

</llo_original>
